<compile_context>
chip_gen: v6e
topology: v6e:2x2x1
jax: 0.10.0
libtpu: 0.0.40
codegen_flags: <defaults>
</compile_context>

<pallas_src>
import functools

import jax
import jax.numpy as jnp
import numpy as np
from jax import lax
from jax.experimental import pallas as pl
from jax.experimental.pallas import tpu as pltpu


def _round_up(x, m):
    return ((x + m - 1) // m) * m


def motive_kernel(max_val,
                  pa_ref, s_ref,
                  ws_enc_ref, bs_enc_ref,
                  we_s_ref, we_pa_ref, be_ref,
                  res_w_ref, res_b_ref, resw_ref,
                  wh1_ref, bh1_ref, wh2_ref, bh2_ref,
                  mu_ref):
    f32 = jnp.float32
    bf16 = jnp.bfloat16
    relu = lambda x: jnp.maximum(x, 0.0)

    # s = self.s_encoder(s)   (Linear + ReLU); bf16 MXU inputs, f32 accumulation.
    # (.astype(bf16) is a no-op if the caller already supplies bf16 activations.)
    s_enc = relu(jnp.dot(s_ref[...].astype(bf16), ws_enc_ref[...],
                         preferred_element_type=f32) + bs_enc_ref[...])

    # output = self.encoder(cat([s, p, a], 1))
    # concat folded into 2 split matmuls (we_pa is the stacked [p|a] weight slice).
    h = relu(jnp.dot(s_enc.astype(bf16), we_s_ref[...], preferred_element_type=f32)
             + jnp.dot(pa_ref[...].astype(bf16), we_pa_ref[...],
                       preferred_element_type=f32)
             + be_ref[...])

    # re-zero residual stack:  h = h + resweight[i] * relu(Linear_i(h))
    depth = res_w_ref.shape[0]          # Python int -> fully unrolled loop below

    def body(i, h):
        lin = (jnp.dot(h.astype(bf16), res_w_ref[i], preferred_element_type=f32)
               + res_b_ref[i])
        return h + resw_ref[i] * relu(lin)

    h = lax.fori_loop(0, depth, body, h, unroll=True)

    # fused heads: wh1 = [wo1 | ws1] (H, 2H); wh2 = blockdiag(wo2, ws2) (2H, out_dim)
    # -> second dot emits the already-concatenated [out_o | out_s].
    hh = relu(jnp.dot(h.astype(bf16), wh1_ref[...], preferred_element_type=f32)
              + bh1_ref[...])
    out = (jnp.dot(hh.astype(bf16), wh2_ref[...], preferred_element_type=f32)
           + bh2_ref[...])

    # mu = _max * tanh(cat([out_o, out_s], 1))   (already concatenated)
    mu_ref[...] = max_val * jnp.tanh(out)


def motive_net_cat_ppo(p, s, a, params, _max=1.0):
    f32, bf16 = jnp.float32, jnp.bfloat16
    B = p.shape[0]
    H = params["we_s"].shape[1]
    depth = int(params["res_w"].shape[0])
    o_dim = params["wo2"].shape[1]
    s_out = params["ws2"].shape[1]
    out_dim = o_dim + s_out

    # ---- host-side fusion of tiny parameter tensors (trace-time, cheap) ------
    pa = jnp.concatenate([p, a], axis=1)
    we_pa = jnp.concatenate([params["we_p"], params["we_a"]], axis=0)

    wh1 = jnp.concatenate([params["wo1"], params["ws1"]], axis=1)        # (H, 2H)
    bh1 = jnp.concatenate([params["bo1"], params["bs1"]], axis=1)        # (1, 2H)
    wh2 = jnp.zeros((2 * H, out_dim), f32)                               # blockdiag
    wh2 = wh2.at[:H, :o_dim].set(params["wo2"])
    wh2 = wh2.at[H:, o_dim:].set(params["ws2"])
    bh2 = jnp.concatenate([params["bo2"], params["bs2"]], axis=1)        # (1, out_dim)

    # bf16 matmul operands (accumulation stays f32 in-kernel); biases stay f32.
    ws_enc = params["ws_enc"].astype(bf16)
    we_s = params["we_s"].astype(bf16)
    we_pa = we_pa.astype(bf16)
    res_w = params["res_w"].astype(bf16)
    wh1 = wh1.astype(bf16)
    wh2 = wh2.astype(bf16)

    # ---- batch tiling ---------------------------------------------------------
    # rows rounded to 16 (bf16 sublane packing); tile_b capped at 512 (vreg/spill
    # headroom on v5e) and chosen so grid_b >= 2 whenever B allows, so the
    # ("parallel",) grid axis keeps both v7x TensorCores busy.
    b16 = _round_up(max(B, 1), 16)
    tile_b = max(16, min(512, _round_up(-(-b16 // 2), 16)))
    grid_b = -(-b16 // tile_b)
    b_pad = grid_b * tile_b
    s_in = s
    if b_pad != B:
        pa = jnp.pad(pa, ((0, b_pad - B), (0, 0)))
        s_in = jnp.pad(s, ((0, b_pad - B), (0, 0)))

    weight_items = [
        ("ws_enc", ws_enc), ("bs_enc", params["bs_enc"]),
        ("we_s", we_s), ("we_pa", we_pa), ("be", params["be"]),
        ("res_w", res_w), ("res_b", params["res_b"]), ("resw", params["resw"]),
        ("wh1", wh1), ("bh1", bh1), ("wh2", wh2), ("bh2", bh2),
    ]
    weights = tuple(w for _, w in weight_items)

    # VMEM budget: resident weights (<= 2 buffers) + double-buffered activation /
    # output tiles + f32 intermediates, plus headroom; clamped to a v7x-safe 64 MiB.
    weight_bytes = sum(int(np.prod(w.shape)) * w.dtype.itemsize for w in weights)
    act_bytes = tile_b * (pa.shape[1] * pa.dtype.itemsize
                          + s_in.shape[1] * s_in.dtype.itemsize)
    out_bytes = tile_b * out_dim * 4
    live_bytes = 8 * tile_b * H * 4
    vmem_need = 2 * weight_bytes + 2 * (act_bytes + out_bytes) + live_bytes + (2 << 20)
    vmem_limit = int(min(64 << 20, max(32 << 20, vmem_need)))

    flops = 2 * b_pad * (H * (s_in.shape[1] + H + pa.shape[1] + depth * H + 2 * H)
                         + 2 * H * out_dim)
    bytes_accessed = (sum(int(np.prod(x.shape)) * x.dtype.itemsize
                          for x in (pa, s_in) + weights)
                      + b_pad * out_dim * 4)

    def act_spec(feat):
        return pl.BlockSpec((tile_b, feat), lambda i: (i, 0))

    def build_call(single_buffer_weights):
        def weight_spec(w):
            kwargs = {}
            if single_buffer_weights:
                # constant index_map -> one resident copy suffices; halves weight VMEM
                kwargs["pipeline_mode"] = pl.Buffered(1)
            return pl.BlockSpec(w.shape, lambda i, nd=w.ndim: (0,) * nd, **kwargs)

        in_specs = [act_spec(pa.shape[1]), act_spec(s_in.shape[1])]
        for name, w in weight_items:
            if name == "resw":          # one scalar per residual layer -> SMEM
                in_specs.append(pl.BlockSpec(memory_space=pltpu.MemorySpace.SMEM))
            else:
                in_specs.append(weight_spec(w))

        return pl.pallas_call(
            functools.partial(motive_kernel, float(_max)),
            out_shape=jax.ShapeDtypeStruct((b_pad, out_dim), f32),
            grid_spec=pltpu.PrefetchScalarGridSpec(
                num_scalar_prefetch=0,
                grid=(grid_b,),
                in_specs=in_specs,
                out_specs=pl.BlockSpec((tile_b, out_dim), lambda i: (i, 0)),
            ),
            compiler_params=pltpu.CompilerParams(
                dimension_semantics=("parallel",),
                vmem_limit_bytes=vmem_limit),
            cost_estimate=pl.CostEstimate(flops=flops,
                                          transcendentals=b_pad * out_dim,
                                          bytes_accessed=bytes_accessed),
        )

    try:
        mu_full = build_call(True)(pa, s_in, *weights)
    except Exception:
        # pipeline_mode=pl.Buffered(1) not supported by this Pallas build ->
        # fall back to default (double-buffered) weight blocks.
        mu_full = build_call(False)(pa, s_in, *weights)

    mu = mu_full if b_pad == B else mu_full[:B]
    # sigma (sigma_train=False) depends only on parameters -> hoisted out of the
    # kernel:  sigma = (sigma.view(1, -1) + zeros_like(mu)).exp()
    sigma = jnp.exp(jnp.broadcast_to(params["sigma"], (B, out_dim)))
    return mu, sigma


def init_params(key, p_dim, s_last, a_dim, o_dim, hidden, depth):
    ks = iter(jax.random.split(key, 32))

    def w(fan_in, fan_out, gain=1.0):
        scale = gain / np.sqrt(fan_in)
        return (jax.random.normal(next(ks), (fan_in, fan_out), jnp.float32)
                * jnp.float32(scale))

    def b(dim):
        return jax.random.normal(next(ks), (1, dim), jnp.float32) * jnp.float32(0.01)

    params = {}
    # s_encoder: Linear(s_last, hidden) + ReLU
    params["ws_enc"], params["bs_enc"] = w(s_last, hidden), b(hidden)
    # encoder: Linear(hidden + p_dim + a_dim, hidden); stored pre-split by input slice
    params["we_s"] = w(hidden, hidden)
    params["we_p"] = w(p_dim, hidden)
    params["we_a"] = w(a_dim, hidden)
    params["be"] = b(hidden)
    # depth residual linear layers (xavier-ish gain sqrt(2)) + re-zero weights
    params["res_w"] = jnp.stack([w(hidden, hidden, gain=np.sqrt(2.0))
                                 for _ in range(depth)], axis=0)
    params["res_b"] = jnp.concatenate([b(hidden) for _ in range(depth)],
                                      axis=0).reshape(depth, 1, hidden)
    # (PyTorch inits resweight to zeros; small random values used so the
    #  residual path is exercised — parameter values are synthetic anyway.)
    params["resw"] = (jax.random.normal(next(ks), (depth,), jnp.float32)
                      * jnp.float32(0.1))
    # output_o head
    params["wo1"], params["bo1"] = w(hidden, hidden), b(hidden)
    params["wo2"], params["bo2"] = w(hidden, o_dim), b(o_dim)
    # output_s head
    params["ws1"], params["bs1"] = w(hidden, hidden), b(hidden)
    params["ws2"], params["bs2"] = w(hidden, s_last), b(s_last)
    # sigma parameter (sigma_train=False): shape (o_dim + s_last,) viewed as (1, -1)
    params["sigma"] = (jax.random.normal(next(ks), (1, o_dim + s_last), jnp.float32)
                       * jnp.float32(0.1))
    return params


def reference(p, s, a, params, _max=1.0):
    relu = lambda x: jnp.maximum(x, 0.0)
    s_enc = relu(s @ params["ws_enc"] + params["bs_enc"])
    h = relu(s_enc @ params["we_s"] + p @ params["we_p"] + a @ params["we_a"]
             + params["be"])
    for i in range(params["res_w"].shape[0]):
        h = h + params["resw"][i] * relu(h @ params["res_w"][i] + params["res_b"][i])
    out_o = relu(h @ params["wo1"] + params["bo1"]) @ params["wo2"] + params["bo2"]
    out_s = relu(h @ params["ws1"] + params["bs1"]) @ params["ws2"] + params["bs2"]
    mu = _max * jnp.tanh(jnp.concatenate([out_o, out_s], axis=1))
    sigma = jnp.exp(jnp.broadcast_to(params["sigma"], mu.shape))
    return mu, sigma


if __name__ == "__main__":
    B, p_dim, a_dim, s_last, o_dim, hidden, depth = 8, 4, 4, 8, 8, 32, 4
    _max = 1.0

    key = jax.random.PRNGKey(0)
    kp, ks, ka, kw = jax.random.split(key, 4)
    p = jax.random.normal(kp, (B, p_dim), jnp.float32)
    s = jax.random.normal(ks, (B, s_last), jnp.float32)
    a = jax.random.normal(ka, (B, a_dim), jnp.float32)
    params = init_params(kw, p_dim, s_last, a_dim, o_dim, hidden, depth)

    mu, sigma = motive_net_cat_ppo(p, s, a, params, _max=_max)
    jax.block_until_ready((mu, sigma))

    mu_ref, sigma_ref = reference(p, s, a, params, _max=_max)
    assert mu.shape == (B, o_dim + s_last) and sigma.shape == (B, o_dim + s_last)
    np.testing.assert_allclose(np.asarray(mu), np.asarray(mu_ref), rtol=2e-2, atol=2e-2)
    np.testing.assert_allclose(np.asarray(sigma), np.asarray(sigma_ref),
                               rtol=2e-2, atol=2e-2)
    print("KERNEL_OK")
</pallas_src>

<mosaic_0001>
module attributes {stable_mosaic.version = 11 : i64} {
  func.func @motive_kernel(%arg0: i32, %arg1: memref<16x8xf32, #tpu.memory_space<vmem>>, %arg2: memref<16x8xf32, #tpu.memory_space<vmem>>, %arg3: memref<8x32xbf16, #tpu.memory_space<vmem>>, %arg4: memref<1x32xf32, #tpu.memory_space<vmem>>, %arg5: memref<32x32xbf16, #tpu.memory_space<vmem>>, %arg6: memref<8x32xbf16, #tpu.memory_space<vmem>>, %arg7: memref<1x32xf32, #tpu.memory_space<vmem>>, %arg8: memref<4x32x32xbf16, #tpu.memory_space<vmem>>, %arg9: memref<4x1x32xf32, #tpu.memory_space<vmem>>, %arg10: memref<4xf32, #tpu.memory_space<smem>>, %arg11: memref<32x64xbf16, #tpu.memory_space<vmem>>, %arg12: memref<1x64xf32, #tpu.memory_space<vmem>>, %arg13: memref<64x16xbf16, #tpu.memory_space<vmem>>, %arg14: memref<1x16xf32, #tpu.memory_space<vmem>>, %arg15: memref<16x16xf32, #tpu.memory_space<vmem>>) attributes {dimension_semantics = [#tpu.dimension_semantics<parallel>], iteration_bounds = array<i64: 1>, scalar_prefetch = 0 : i64, scratch_operands = 0 : i64, tpu.core_type = #tpu.core_type<tc>, window_params = [{transform_indices = @transform_0, window_bounds = array<i64: 16, 8>}, {transform_indices = @transform_1, window_bounds = array<i64: 16, 8>}, {pipeline_mode = #tpu.pipeline_mode<synchronous>, transform_indices = @transform_2, window_bounds = array<i64: 8, 32>}, {pipeline_mode = #tpu.pipeline_mode<synchronous>, transform_indices = @transform_3, window_bounds = array<i64: 1, 32>}, {pipeline_mode = #tpu.pipeline_mode<synchronous>, transform_indices = @transform_4, window_bounds = array<i64: 32, 32>}, {pipeline_mode = #tpu.pipeline_mode<synchronous>, transform_indices = @transform_5, window_bounds = array<i64: 8, 32>}, {pipeline_mode = #tpu.pipeline_mode<synchronous>, transform_indices = @transform_6, window_bounds = array<i64: 1, 32>}, {pipeline_mode = #tpu.pipeline_mode<synchronous>, transform_indices = @transform_7, window_bounds = array<i64: 4, 32, 32>}, {pipeline_mode = #tpu.pipeline_mode<synchronous>, transform_indices = @transform_8, window_bounds = array<i64: 4, 1, 32>}, {transform_indices = @transform_9, window_bounds = array<i64: 4>}, {pipeline_mode = #tpu.pipeline_mode<synchronous>, transform_indices = @transform_10, window_bounds = array<i64: 32, 64>}, {pipeline_mode = #tpu.pipeline_mode<synchronous>, transform_indices = @transform_11, window_bounds = array<i64: 1, 64>}, {pipeline_mode = #tpu.pipeline_mode<synchronous>, transform_indices = @transform_12, window_bounds = array<i64: 64, 16>}, {pipeline_mode = #tpu.pipeline_mode<synchronous>, transform_indices = @transform_13, window_bounds = array<i64: 1, 16>}, {transform_indices = @transform_14, window_bounds = array<i64: 16, 16>}]} {
    %c0 = arith.constant 0 : index
    %c0_0 = arith.constant 0 : index
    %0 = vector.load %arg2[%c0, %c0_0] : memref<16x8xf32, #tpu.memory_space<vmem>>, vector<16x8xf32>
    %1 = arith.truncf %0 : vector<16x8xf32> to vector<16x8xbf16>
    %c0_1 = arith.constant 0 : index
    %c0_2 = arith.constant 0 : index
    %2 = vector.load %arg3[%c0_1, %c0_2] : memref<8x32xbf16, #tpu.memory_space<vmem>>, vector<8x32xbf16>
    %cst = arith.constant dense<0.000000e+00> : vector<16x32xf32>
    %3 = tpu.matmul %1, %2, %cst {dimension_numbers = #tpu.dot_dimension_numbers<[1], [0], [0], [1], [0, 0, 1, 1], [], []>} : vector<16x8xbf16>, vector<8x32xbf16>, vector<16x32xf32> -> vector<16x32xf32>
    %c0_3 = arith.constant 0 : index
    %c0_4 = arith.constant 0 : index
    %4 = vector.load %arg4[%c0_3, %c0_4] : memref<1x32xf32, #tpu.memory_space<vmem>>, vector<1x32xf32>
    %5 = vector.broadcast %4 : vector<1x32xf32> to vector<16x32xf32>
    %6 = arith.addf %3, %5 : vector<16x32xf32>
    %cst_5 = arith.constant 0.000000e+00 : f32
    %7 = vector.broadcast %cst_5 : f32 to vector<16x32xf32>
    %8 = arith.maximumf %6, %7 : vector<16x32xf32>
    %9 = arith.truncf %8 : vector<16x32xf32> to vector<16x32xbf16>
    %c0_6 = arith.constant 0 : index
    %c0_7 = arith.constant 0 : index
    %10 = vector.load %arg5[%c0_6, %c0_7] : memref<32x32xbf16, #tpu.memory_space<vmem>>, vector<32x32xbf16>
    %cst_8 = arith.constant dense<0.000000e+00> : vector<16x32xf32>
    %11 = tpu.matmul %9, %10, %cst_8 {dimension_numbers = #tpu.dot_dimension_numbers<[1], [0], [0], [1], [0, 0, 1, 1], [], []>} : vector<16x32xbf16>, vector<32x32xbf16>, vector<16x32xf32> -> vector<16x32xf32>
    %c0_9 = arith.constant 0 : index
    %c0_10 = arith.constant 0 : index
    %12 = vector.load %arg1[%c0_9, %c0_10] : memref<16x8xf32, #tpu.memory_space<vmem>>, vector<16x8xf32>
    %13 = arith.truncf %12 : vector<16x8xf32> to vector<16x8xbf16>
    %c0_11 = arith.constant 0 : index
    %c0_12 = arith.constant 0 : index
    %14 = vector.load %arg6[%c0_11, %c0_12] : memref<8x32xbf16, #tpu.memory_space<vmem>>, vector<8x32xbf16>
    %cst_13 = arith.constant dense<0.000000e+00> : vector<16x32xf32>
    %15 = tpu.matmul %13, %14, %cst_13 {dimension_numbers = #tpu.dot_dimension_numbers<[1], [0], [0], [1], [0, 0, 1, 1], [], []>} : vector<16x8xbf16>, vector<8x32xbf16>, vector<16x32xf32> -> vector<16x32xf32>
    %16 = arith.addf %11, %15 : vector<16x32xf32>
    %c0_14 = arith.constant 0 : index
    %c0_15 = arith.constant 0 : index
    %17 = vector.load %arg7[%c0_14, %c0_15] : memref<1x32xf32, #tpu.memory_space<vmem>>, vector<1x32xf32>
    %18 = vector.broadcast %17 : vector<1x32xf32> to vector<16x32xf32>
    %19 = arith.addf %16, %18 : vector<16x32xf32>
    %cst_16 = arith.constant 0.000000e+00 : f32
    %20 = vector.broadcast %cst_16 : f32 to vector<16x32xf32>
    %21 = arith.maximumf %19, %20 : vector<16x32xf32>
    %c0_i32 = arith.constant 0 : i32
    %22 = arith.truncf %21 : vector<16x32xf32> to vector<16x32xbf16>
    %23 = arith.index_cast %c0_i32 : i32 to index
    %c0_17 = arith.constant 0 : index
    %c0_18 = arith.constant 0 : index
    %24 = vector.load %arg8[%23, %c0_17, %c0_18] : memref<4x32x32xbf16, #tpu.memory_space<vmem>>, vector<1x32x32xbf16>
    %25 = vector.shape_cast %24 : vector<1x32x32xbf16> to vector<32x32xbf16>
    %cst_19 = arith.constant dense<0.000000e+00> : vector<16x32xf32>
    %26 = tpu.matmul %22, %25, %cst_19 {dimension_numbers = #tpu.dot_dimension_numbers<[1], [0], [0], [1], [0, 0, 1, 1], [], []>} : vector<16x32xbf16>, vector<32x32xbf16>, vector<16x32xf32> -> vector<16x32xf32>
    %27 = arith.index_cast %c0_i32 : i32 to index
    %c0_20 = arith.constant 0 : index
    %c0_21 = arith.constant 0 : index
    %28 = vector.load %arg9[%27, %c0_20, %c0_21] : memref<4x1x32xf32, #tpu.memory_space<vmem>>, vector<1x1x32xf32>
    %29 = vector.shape_cast %28 : vector<1x1x32xf32> to vector<1x32xf32>
    %30 = vector.broadcast %29 : vector<1x32xf32> to vector<16x32xf32>
    %31 = arith.addf %26, %30 : vector<16x32xf32>
    %32 = arith.index_cast %c0_i32 : i32 to index
    %33 = memref.load %arg10[%32] : memref<4xf32, #tpu.memory_space<smem>>
    %cst_22 = arith.constant 0.000000e+00 : f32
    %34 = vector.broadcast %cst_22 : f32 to vector<16x32xf32>
    %35 = arith.maximumf %31, %34 : vector<16x32xf32>
    %36 = vector.broadcast %33 : f32 to vector<16x32xf32>
    %37 = arith.mulf %36, %35 : vector<16x32xf32>
    %38 = arith.addf %21, %37 : vector<16x32xf32>
    %c1_i32 = arith.constant 1 : i32
    %39 = arith.truncf %38 : vector<16x32xf32> to vector<16x32xbf16>
    %40 = arith.index_cast %c1_i32 : i32 to index
    %c0_23 = arith.constant 0 : index
    %c0_24 = arith.constant 0 : index
    %41 = vector.load %arg8[%40, %c0_23, %c0_24] : memref<4x32x32xbf16, #tpu.memory_space<vmem>>, vector<1x32x32xbf16>
    %42 = vector.shape_cast %41 : vector<1x32x32xbf16> to vector<32x32xbf16>
    %cst_25 = arith.constant dense<0.000000e+00> : vector<16x32xf32>
    %43 = tpu.matmul %39, %42, %cst_25 {dimension_numbers = #tpu.dot_dimension_numbers<[1], [0], [0], [1], [0, 0, 1, 1], [], []>} : vector<16x32xbf16>, vector<32x32xbf16>, vector<16x32xf32> -> vector<16x32xf32>
    %44 = arith.index_cast %c1_i32 : i32 to index
    %c0_26 = arith.constant 0 : index
    %c0_27 = arith.constant 0 : index
    %45 = vector.load %arg9[%44, %c0_26, %c0_27] : memref<4x1x32xf32, #tpu.memory_space<vmem>>, vector<1x1x32xf32>
    %46 = vector.shape_cast %45 : vector<1x1x32xf32> to vector<1x32xf32>
    %47 = vector.broadcast %46 : vector<1x32xf32> to vector<16x32xf32>
    %48 = arith.addf %43, %47 : vector<16x32xf32>
    %49 = arith.index_cast %c1_i32 : i32 to index
    %50 = memref.load %arg10[%49] : memref<4xf32, #tpu.memory_space<smem>>
    %cst_28 = arith.constant 0.000000e+00 : f32
    %51 = vector.broadcast %cst_28 : f32 to vector<16x32xf32>
    %52 = arith.maximumf %48, %51 : vector<16x32xf32>
    %53 = vector.broadcast %50 : f32 to vector<16x32xf32>
    %54 = arith.mulf %53, %52 : vector<16x32xf32>
    %55 = arith.addf %38, %54 : vector<16x32xf32>
    %c2_i32 = arith.constant 2 : i32
    %56 = arith.truncf %55 : vector<16x32xf32> to vector<16x32xbf16>
    %57 = arith.index_cast %c2_i32 : i32 to index
    %c0_29 = arith.constant 0 : index
    %c0_30 = arith.constant 0 : index
    %58 = vector.load %arg8[%57, %c0_29, %c0_30] : memref<4x32x32xbf16, #tpu.memory_space<vmem>>, vector<1x32x32xbf16>
    %59 = vector.shape_cast %58 : vector<1x32x32xbf16> to vector<32x32xbf16>
    %cst_31 = arith.constant dense<0.000000e+00> : vector<16x32xf32>
    %60 = tpu.matmul %56, %59, %cst_31 {dimension_numbers = #tpu.dot_dimension_numbers<[1], [0], [0], [1], [0, 0, 1, 1], [], []>} : vector<16x32xbf16>, vector<32x32xbf16>, vector<16x32xf32> -> vector<16x32xf32>
    %61 = arith.index_cast %c2_i32 : i32 to index
    %c0_32 = arith.constant 0 : index
    %c0_33 = arith.constant 0 : index
    %62 = vector.load %arg9[%61, %c0_32, %c0_33] : memref<4x1x32xf32, #tpu.memory_space<vmem>>, vector<1x1x32xf32>
    %63 = vector.shape_cast %62 : vector<1x1x32xf32> to vector<1x32xf32>
    %64 = vector.broadcast %63 : vector<1x32xf32> to vector<16x32xf32>
    %65 = arith.addf %60, %64 : vector<16x32xf32>
    %66 = arith.index_cast %c2_i32 : i32 to index
    %67 = memref.load %arg10[%66] : memref<4xf32, #tpu.memory_space<smem>>
    %cst_34 = arith.constant 0.000000e+00 : f32
    %68 = vector.broadcast %cst_34 : f32 to vector<16x32xf32>
    %69 = arith.maximumf %65, %68 : vector<16x32xf32>
    %70 = vector.broadcast %67 : f32 to vector<16x32xf32>
    %71 = arith.mulf %70, %69 : vector<16x32xf32>
    %72 = arith.addf %55, %71 : vector<16x32xf32>
    %c3_i32 = arith.constant 3 : i32
    %73 = arith.truncf %72 : vector<16x32xf32> to vector<16x32xbf16>
    %74 = arith.index_cast %c3_i32 : i32 to index
    %c0_35 = arith.constant 0 : index
    %c0_36 = arith.constant 0 : index
    %75 = vector.load %arg8[%74, %c0_35, %c0_36] : memref<4x32x32xbf16, #tpu.memory_space<vmem>>, vector<1x32x32xbf16>
    %76 = vector.shape_cast %75 : vector<1x32x32xbf16> to vector<32x32xbf16>
    %cst_37 = arith.constant dense<0.000000e+00> : vector<16x32xf32>
    %77 = tpu.matmul %73, %76, %cst_37 {dimension_numbers = #tpu.dot_dimension_numbers<[1], [0], [0], [1], [0, 0, 1, 1], [], []>} : vector<16x32xbf16>, vector<32x32xbf16>, vector<16x32xf32> -> vector<16x32xf32>
    %78 = arith.index_cast %c3_i32 : i32 to index
    %c0_38 = arith.constant 0 : index
    %c0_39 = arith.constant 0 : index
    %79 = vector.load %arg9[%78, %c0_38, %c0_39] : memref<4x1x32xf32, #tpu.memory_space<vmem>>, vector<1x1x32xf32>
    %80 = vector.shape_cast %79 : vector<1x1x32xf32> to vector<1x32xf32>
    %81 = vector.broadcast %80 : vector<1x32xf32> to vector<16x32xf32>
    %82 = arith.addf %77, %81 : vector<16x32xf32>
    %83 = arith.index_cast %c3_i32 : i32 to index
    %84 = memref.load %arg10[%83] : memref<4xf32, #tpu.memory_space<smem>>
    %cst_40 = arith.constant 0.000000e+00 : f32
    %85 = vector.broadcast %cst_40 : f32 to vector<16x32xf32>
    %86 = arith.maximumf %82, %85 : vector<16x32xf32>
    %87 = vector.broadcast %84 : f32 to vector<16x32xf32>
    %88 = arith.mulf %87, %86 : vector<16x32xf32>
    %89 = arith.addf %72, %88 : vector<16x32xf32>
    %c4_i32 = arith.constant 4 : i32
    %90 = arith.truncf %89 : vector<16x32xf32> to vector<16x32xbf16>
    %c0_41 = arith.constant 0 : index
    %c0_42 = arith.constant 0 : index
    %91 = vector.load %arg11[%c0_41, %c0_42] : memref<32x64xbf16, #tpu.memory_space<vmem>>, vector<32x64xbf16>
    %cst_43 = arith.constant dense<0.000000e+00> : vector<16x64xf32>
    %92 = tpu.matmul %90, %91, %cst_43 {dimension_numbers = #tpu.dot_dimension_numbers<[1], [0], [0], [1], [0, 0, 1, 1], [], []>} : vector<16x32xbf16>, vector<32x64xbf16>, vector<16x64xf32> -> vector<16x64xf32>
    %c0_44 = arith.constant 0 : index
    %c0_45 = arith.constant 0 : index
    %93 = vector.load %arg12[%c0_44, %c0_45] : memref<1x64xf32, #tpu.memory_space<vmem>>, vector<1x64xf32>
    %94 = vector.broadcast %93 : vector<1x64xf32> to vector<16x64xf32>
    %95 = arith.addf %92, %94 : vector<16x64xf32>
    %cst_46 = arith.constant 0.000000e+00 : f32
    %96 = vector.broadcast %cst_46 : f32 to vector<16x64xf32>
    %97 = arith.maximumf %95, %96 : vector<16x64xf32>
    %98 = arith.truncf %97 : vector<16x64xf32> to vector<16x64xbf16>
    %c0_47 = arith.constant 0 : index
    %c0_48 = arith.constant 0 : index
    %99 = vector.load %arg13[%c0_47, %c0_48] : memref<64x16xbf16, #tpu.memory_space<vmem>>, vector<64x16xbf16>
    %cst_49 = arith.constant dense<0.000000e+00> : vector<16x16xf32>
    %100 = tpu.matmul %98, %99, %cst_49 {dimension_numbers = #tpu.dot_dimension_numbers<[1], [0], [0], [1], [0, 0, 1, 1], [], []>} : vector<16x64xbf16>, vector<64x16xbf16>, vector<16x16xf32> -> vector<16x16xf32>
    %c0_50 = arith.constant 0 : index
    %c0_51 = arith.constant 0 : index
    %101 = vector.load %arg14[%c0_50, %c0_51] : memref<1x16xf32, #tpu.memory_space<vmem>>, vector<1x16xf32>
    %102 = vector.broadcast %101 : vector<1x16xf32> to vector<16x16xf32>
    %103 = arith.addf %100, %102 : vector<16x16xf32>
    %104 = math.tanh %103 : vector<16x16xf32>
    %cst_52 = arith.constant 1.000000e+00 : f32
    %105 = vector.broadcast %cst_52 : f32 to vector<16x16xf32>
    %106 = arith.mulf %105, %104 : vector<16x16xf32>
    %c0_53 = arith.constant 0 : index
    %c0_54 = arith.constant 0 : index
    %107 = vector.load %arg15[%c0_53, %c0_54] : memref<16x16xf32, #tpu.memory_space<vmem>>, vector<16x16xf32>
    tpu.vector_store %arg15[%c0_53, %c0_54], %106 {strides = array<i32>} : memref<16x16xf32, #tpu.memory_space<vmem>>, vector<16x16xf32>,
    return
  }
  func.func @transform_0(%arg0: i32) -> (i32, i32) {
    %c0_i32 = arith.constant 0 : i32
    %c0_i32_0 = arith.constant 0 : i32
    return %arg0, %c0_i32 : i32, i32
  }
  func.func @transform_1(%arg0: i32) -> (i32, i32) {
    %c0_i32 = arith.constant 0 : i32
    %c0_i32_0 = arith.constant 0 : i32
    return %arg0, %c0_i32 : i32, i32
  }
  func.func @transform_2(%arg0: i32) -> (i32, i32) {
    %c0_i32 = arith.constant 0 : i32
    %c0_i32_0 = arith.constant 0 : i32
    %c0_i32_1 = arith.constant 0 : i32
    return %c0_i32, %c0_i32_0 : i32, i32
  }
  func.func @transform_3(%arg0: i32) -> (i32, i32) {
    %c0_i32 = arith.constant 0 : i32
    %c0_i32_0 = arith.constant 0 : i32
    %c0_i32_1 = arith.constant 0 : i32
    return %c0_i32, %c0_i32_0 : i32, i32
  }
  func.func @transform_4(%arg0: i32) -> (i32, i32) {
    %c0_i32 = arith.constant 0 : i32
    %c0_i32_0 = arith.constant 0 : i32
    %c0_i32_1 = arith.constant 0 : i32
    return %c0_i32, %c0_i32_0 : i32, i32
  }
  func.func @transform_5(%arg0: i32) -> (i32, i32) {
    %c0_i32 = arith.constant 0 : i32
    %c0_i32_0 = arith.constant 0 : i32
    %c0_i32_1 = arith.constant 0 : i32
    return %c0_i32, %c0_i32_0 : i32, i32
  }
  func.func @transform_6(%arg0: i32) -> (i32, i32) {
    %c0_i32 = arith.constant 0 : i32
    %c0_i32_0 = arith.constant 0 : i32
    %c0_i32_1 = arith.constant 0 : i32
    return %c0_i32, %c0_i32_0 : i32, i32
  }
  func.func @transform_7(%arg0: i32) -> (i32, i32, i32) {
    %c0_i32 = arith.constant 0 : i32
    %c0_i32_0 = arith.constant 0 : i32
    %c0_i32_1 = arith.constant 0 : i32
    %c0_i32_2 = arith.constant 0 : i32
    return %c0_i32, %c0_i32_0, %c0_i32_1 : i32, i32, i32
  }
  func.func @transform_8(%arg0: i32) -> (i32, i32, i32) {
    %c0_i32 = arith.constant 0 : i32
    %c0_i32_0 = arith.constant 0 : i32
    %c0_i32_1 = arith.constant 0 : i32
    %c0_i32_2 = arith.constant 0 : i32
    return %c0_i32, %c0_i32_0, %c0_i32_1 : i32, i32, i32
  }
  func.func @transform_9(%arg0: i32) -> i32 {
    %c0_i32 = arith.constant 0 : i32
    %c0_i32_0 = arith.constant 0 : i32
    return %c0_i32 : i32
  }
  func.func @transform_10(%arg0: i32) -> (i32, i32) {
    %c0_i32 = arith.constant 0 : i32
    %c0_i32_0 = arith.constant 0 : i32
    %c0_i32_1 = arith.constant 0 : i32
    return %c0_i32, %c0_i32_0 : i32, i32
  }
  func.func @transform_11(%arg0: i32) -> (i32, i32) {
    %c0_i32 = arith.constant 0 : i32
    %c0_i32_0 = arith.constant 0 : i32
    %c0_i32_1 = arith.constant 0 : i32
    return %c0_i32, %c0_i32_0 : i32, i32
  }
  func.func @transform_12(%arg0: i32) -> (i32, i32) {
    %c0_i32 = arith.constant 0 : i32
    %c0_i32_0 = arith.constant 0 : i32
    %c0_i32_1 = arith.constant 0 : i32
    return %c0_i32, %c0_i32_0 : i32, i32
  }
  func.func @transform_13(%arg0: i32) -> (i32, i32) {
    %c0_i32 = arith.constant 0 : i32
    %c0_i32_0 = arith.constant 0 : i32
    %c0_i32_1 = arith.constant 0 : i32
    return %c0_i32, %c0_i32_0 : i32, i32
  }
  func.func @transform_14(%arg0: i32) -> (i32, i32) {
    %c0_i32 = arith.constant 0 : i32
    %c0_i32_0 = arith.constant 0 : i32
    return %arg0, %c0_i32 : i32, i32
  }
}

module attributes {stable_mosaic.version = 11 : i64} {
  func.func @motive_kernel(%arg0: i32, %arg1: memref<16x8xf32, #tpu.memory_space<vmem>>, %arg2: memref<16x8xf32, #tpu.memory_space<vmem>>, %arg3: memref<8x32xbf16, #tpu.memory_space<vmem>>, %arg4: memref<1x32xf32, #tpu.memory_space<vmem>>, %arg5: memref<32x32xbf16, #tpu.memory_space<vmem>>, %arg6: memref<8x32xbf16, #tpu.memory_space<vmem>>, %arg7: memref<1x32xf32, #tpu.memory_space<vmem>>, %arg8: memref<4x32x32xbf16, #tpu.memory_space<vmem>>, %arg9: memref<4x1x32xf32, #tpu.memory_space<vmem>>, %arg10: memref<4xf32, #tpu.memory_space<smem>>, %arg11: memref<32x64xbf16, #tpu.memory_space<vmem>>, %arg12: memref<1x64xf32, #tpu.memory_space<vmem>>, %arg13: memref<64x16xbf16, #tpu.memory_space<vmem>>, %arg14: memref<1x16xf32, #tpu.memory_space<vmem>>, %arg15: memref<16x16xf32, #tpu.memory_space<vmem>>) attributes {dimension_semantics = [#tpu.dimension_semantics<parallel>], iteration_bounds = array<i64: 1>, scalar_prefetch = 0 : i64, scratch_operands = 0 : i64, tpu.core_type = #tpu.core_type<tc>, window_params = [{transform_indices = @transform_0, window_bounds = array<i64: 16, 8>}, {transform_indices = @transform_1, window_bounds = array<i64: 16, 8>}, {pipeline_mode = #tpu.pipeline_mode<synchronous>, transform_indices = @transform_2, window_bounds = array<i64: 8, 32>}, {pipeline_mode = #tpu.pipeline_mode<synchronous>, transform_indices = @transform_3, window_bounds = array<i64: 1, 32>}, {pipeline_mode = #tpu.pipeline_mode<synchronous>, transform_indices = @transform_4, window_bounds = array<i64: 32, 32>}, {pipeline_mode = #tpu.pipeline_mode<synchronous>, transform_indices = @transform_5, window_bounds = array<i64: 8, 32>}, {pipeline_mode = #tpu.pipeline_mode<synchronous>, transform_indices = @transform_6, window_bounds = array<i64: 1, 32>}, {pipeline_mode = #tpu.pipeline_mode<synchronous>, transform_indices = @transform_7, window_bounds = array<i64: 4, 32, 32>}, {pipeline_mode = #tpu.pipeline_mode<synchronous>, transform_indices = @transform_8, window_bounds = array<i64: 4, 1, 32>}, {transform_indices = @transform_9, window_bounds = array<i64: 4>}, {pipeline_mode = #tpu.pipeline_mode<synchronous>, transform_indices = @transform_10, window_bounds = array<i64: 32, 64>}, {pipeline_mode = #tpu.pipeline_mode<synchronous>, transform_indices = @transform_11, window_bounds = array<i64: 1, 64>}, {pipeline_mode = #tpu.pipeline_mode<synchronous>, transform_indices = @transform_12, window_bounds = array<i64: 64, 16>}, {pipeline_mode = #tpu.pipeline_mode<synchronous>, transform_indices = @transform_13, window_bounds = array<i64: 1, 16>}, {transform_indices = @transform_14, window_bounds = array<i64: 16, 16>}]} {
    %c0 = arith.constant 0 : index
    %c0_0 = arith.constant 0 : index
    %0 = vector.load %arg2[%c0, %c0_0] : memref<16x8xf32, #tpu.memory_space<vmem>>, vector<16x8xf32>
    %1 = arith.truncf %0 : vector<16x8xf32> to vector<16x8xbf16>
    %c0_1 = arith.constant 0 : index
    %c0_2 = arith.constant 0 : index
    %2 = vector.load %arg3[%c0_1, %c0_2] : memref<8x32xbf16, #tpu.memory_space<vmem>>, vector<8x32xbf16>
    %cst = arith.constant dense<0.000000e+00> : vector<16x32xf32>
    %3 = tpu.matmul %1, %2, %cst {dimension_numbers = #tpu.dot_dimension_numbers<[1], [0], [0], [1], [0, 0, 1, 1], [], []>} : vector<16x8xbf16>, vector<8x32xbf16>, vector<16x32xf32> -> vector<16x32xf32>
    %c0_3 = arith.constant 0 : index
    %c0_4 = arith.constant 0 : index
    %4 = vector.load %arg4[%c0_3, %c0_4] : memref<1x32xf32, #tpu.memory_space<vmem>>, vector<1x32xf32>
    %5 = vector.broadcast %4 : vector<1x32xf32> to vector<16x32xf32>
    %6 = arith.addf %3, %5 : vector<16x32xf32>
    %cst_5 = arith.constant 0.000000e+00 : f32
    %7 = vector.broadcast %cst_5 : f32 to vector<16x32xf32>
    %8 = arith.maximumf %6, %7 : vector<16x32xf32>
    %9 = arith.truncf %8 : vector<16x32xf32> to vector<16x32xbf16>
    %c0_6 = arith.constant 0 : index
    %c0_7 = arith.constant 0 : index
    %10 = vector.load %arg5[%c0_6, %c0_7] : memref<32x32xbf16, #tpu.memory_space<vmem>>, vector<32x32xbf16>
    %cst_8 = arith.constant dense<0.000000e+00> : vector<16x32xf32>
    %11 = tpu.matmul %9, %10, %cst_8 {dimension_numbers = #tpu.dot_dimension_numbers<[1], [0], [0], [1], [0, 0, 1, 1], [], []>} : vector<16x32xbf16>, vector<32x32xbf16>, vector<16x32xf32> -> vector<16x32xf32>
    %c0_9 = arith.constant 0 : index
    %c0_10 = arith.constant 0 : index
    %12 = vector.load %arg1[%c0_9, %c0_10] : memref<16x8xf32, #tpu.memory_space<vmem>>, vector<16x8xf32>
    %13 = arith.truncf %12 : vector<16x8xf32> to vector<16x8xbf16>
    %c0_11 = arith.constant 0 : index
    %c0_12 = arith.constant 0 : index
    %14 = vector.load %arg6[%c0_11, %c0_12] : memref<8x32xbf16, #tpu.memory_space<vmem>>, vector<8x32xbf16>
    %cst_13 = arith.constant dense<0.000000e+00> : vector<16x32xf32>
    %15 = tpu.matmul %13, %14, %cst_13 {dimension_numbers = #tpu.dot_dimension_numbers<[1], [0], [0], [1], [0, 0, 1, 1], [], []>} : vector<16x8xbf16>, vector<8x32xbf16>, vector<16x32xf32> -> vector<16x32xf32>
    %16 = arith.addf %11, %15 : vector<16x32xf32>
    %c0_14 = arith.constant 0 : index
    %c0_15 = arith.constant 0 : index
    %17 = vector.load %arg7[%c0_14, %c0_15] : memref<1x32xf32, #tpu.memory_space<vmem>>, vector<1x32xf32>
    %18 = vector.broadcast %17 : vector<1x32xf32> to vector<16x32xf32>
    %19 = arith.addf %16, %18 : vector<16x32xf32>
    %cst_16 = arith.constant 0.000000e+00 : f32
    %20 = vector.broadcast %cst_16 : f32 to vector<16x32xf32>
    %21 = arith.maximumf %19, %20 : vector<16x32xf32>
    %c0_i32 = arith.constant 0 : i32
    %22 = arith.truncf %21 : vector<16x32xf32> to vector<16x32xbf16>
    %23 = arith.index_cast %c0_i32 : i32 to index
    %c0_17 = arith.constant 0 : index
    %c0_18 = arith.constant 0 : index
    %24 = vector.load %arg8[%23, %c0_17, %c0_18] : memref<4x32x32xbf16, #tpu.memory_space<vmem>>, vector<1x32x32xbf16>
    %25 = vector.shape_cast %24 : vector<1x32x32xbf16> to vector<32x32xbf16>
    %cst_19 = arith.constant dense<0.000000e+00> : vector<16x32xf32>
    %26 = tpu.matmul %22, %25, %cst_19 {dimension_numbers = #tpu.dot_dimension_numbers<[1], [0], [0], [1], [0, 0, 1, 1], [], []>} : vector<16x32xbf16>, vector<32x32xbf16>, vector<16x32xf32> -> vector<16x32xf32>
    %27 = arith.index_cast %c0_i32 : i32 to index
    %c0_20 = arith.constant 0 : index
    %c0_21 = arith.constant 0 : index
    %28 = vector.load %arg9[%27, %c0_20, %c0_21] : memref<4x1x32xf32, #tpu.memory_space<vmem>>, vector<1x1x32xf32>
    %29 = vector.shape_cast %28 : vector<1x1x32xf32> to vector<1x32xf32>
    %30 = vector.broadcast %29 : vector<1x32xf32> to vector<16x32xf32>
    %31 = arith.addf %26, %30 : vector<16x32xf32>
    %32 = arith.index_cast %c0_i32 : i32 to index
    %33 = memref.load %arg10[%32] : memref<4xf32, #tpu.memory_space<smem>>
    %cst_22 = arith.constant 0.000000e+00 : f32
    %34 = vector.broadcast %cst_22 : f32 to vector<16x32xf32>
    %35 = arith.maximumf %31, %34 : vector<16x32xf32>
    %36 = vector.broadcast %33 : f32 to vector<16x32xf32>
    %37 = arith.mulf %36, %35 : vector<16x32xf32>
    %38 = arith.addf %21, %37 : vector<16x32xf32>
    %c1_i32 = arith.constant 1 : i32
    %39 = arith.truncf %38 : vector<16x32xf32> to vector<16x32xbf16>
    %40 = arith.index_cast %c1_i32 : i32 to index
    %c0_23 = arith.constant 0 : index
    %c0_24 = arith.constant 0 : index
    %41 = vector.load %arg8[%40, %c0_23, %c0_24] : memref<4x32x32xbf16, #tpu.memory_space<vmem>>, vector<1x32x32xbf16>
    %42 = vector.shape_cast %41 : vector<1x32x32xbf16> to vector<32x32xbf16>
    %cst_25 = arith.constant dense<0.000000e+00> : vector<16x32xf32>
    %43 = tpu.matmul %39, %42, %cst_25 {dimension_numbers = #tpu.dot_dimension_numbers<[1], [0], [0], [1], [0, 0, 1, 1], [], []>} : vector<16x32xbf16>, vector<32x32xbf16>, vector<16x32xf32> -> vector<16x32xf32>
    %44 = arith.index_cast %c1_i32 : i32 to index
    %c0_26 = arith.constant 0 : index
    %c0_27 = arith.constant 0 : index
    %45 = vector.load %arg9[%44, %c0_26, %c0_27] : memref<4x1x32xf32, #tpu.memory_space<vmem>>, vector<1x1x32xf32>
    %46 = vector.shape_cast %45 : vector<1x1x32xf32> to vector<1x32xf32>
    %47 = vector.broadcast %46 : vector<1x32xf32> to vector<16x32xf32>
    %48 = arith.addf %43, %47 : vector<16x32xf32>
    %49 = arith.index_cast %c1_i32 : i32 to index
    %50 = memref.load %arg10[%49] : memref<4xf32, #tpu.memory_space<smem>>
    %cst_28 = arith.constant 0.000000e+00 : f32
    %51 = vector.broadcast %cst_28 : f32 to vector<16x32xf32>
    %52 = arith.maximumf %48, %51 : vector<16x32xf32>
    %53 = vector.broadcast %50 : f32 to vector<16x32xf32>
    %54 = arith.mulf %53, %52 : vector<16x32xf32>
    %55 = arith.addf %38, %54 : vector<16x32xf32>
    %c2_i32 = arith.constant 2 : i32
    %56 = arith.truncf %55 : vector<16x32xf32> to vector<16x32xbf16>
    %57 = arith.index_cast %c2_i32 : i32 to index
    %c0_29 = arith.constant 0 : index
    %c0_30 = arith.constant 0 : index
    %58 = vector.load %arg8[%57, %c0_29, %c0_30] : memref<4x32x32xbf16, #tpu.memory_space<vmem>>, vector<1x32x32xbf16>
    %59 = vector.shape_cast %58 : vector<1x32x32xbf16> to vector<32x32xbf16>
    %cst_31 = arith.constant dense<0.000000e+00> : vector<16x32xf32>
    %60 = tpu.matmul %56, %59, %cst_31 {dimension_numbers = #tpu.dot_dimension_numbers<[1], [0], [0], [1], [0, 0, 1, 1], [], []>} : vector<16x32xbf16>, vector<32x32xbf16>, vector<16x32xf32> -> vector<16x32xf32>
    %61 = arith.index_cast %c2_i32 : i32 to index
    %c0_32 = arith.constant 0 : index
    %c0_33 = arith.constant 0 : index
    %62 = vector.load %arg9[%61, %c0_32, %c0_33] : memref<4x1x32xf32, #tpu.memory_space<vmem>>, vector<1x1x32xf32>
    %63 = vector.shape_cast %62 : vector<1x1x32xf32> to vector<1x32xf32>
    %64 = vector.broadcast %63 : vector<1x32xf32> to vector<16x32xf32>
    %65 = arith.addf %60, %64 : vector<16x32xf32>
    %66 = arith.index_cast %c2_i32 : i32 to index
    %67 = memref.load %arg10[%66] : memref<4xf32, #tpu.memory_space<smem>>
    %cst_34 = arith.constant 0.000000e+00 : f32
    %68 = vector.broadcast %cst_34 : f32 to vector<16x32xf32>
    %69 = arith.maximumf %65, %68 : vector<16x32xf32>
    %70 = vector.broadcast %67 : f32 to vector<16x32xf32>
    %71 = arith.mulf %70, %69 : vector<16x32xf32>
    %72 = arith.addf %55, %71 : vector<16x32xf32>
    %c3_i32 = arith.constant 3 : i32
    %73 = arith.truncf %72 : vector<16x32xf32> to vector<16x32xbf16>
    %74 = arith.index_cast %c3_i32 : i32 to index
    %c0_35 = arith.constant 0 : index
    %c0_36 = arith.constant 0 : index
    %75 = vector.load %arg8[%74, %c0_35, %c0_36] : memref<4x32x32xbf16, #tpu.memory_space<vmem>>, vector<1x32x32xbf16>
    %76 = vector.shape_cast %75 : vector<1x32x32xbf16> to vector<32x32xbf16>
    %cst_37 = arith.constant dense<0.000000e+00> : vector<16x32xf32>
    %77 = tpu.matmul %73, %76, %cst_37 {dimension_numbers = #tpu.dot_dimension_numbers<[1], [0], [0], [1], [0, 0, 1, 1], [], []>} : vector<16x32xbf16>, vector<32x32xbf16>, vector<16x32xf32> -> vector<16x32xf32>
    %78 = arith.index_cast %c3_i32 : i32 to index
    %c0_38 = arith.constant 0 : index
    %c0_39 = arith.constant 0 : index
    %79 = vector.load %arg9[%78, %c0_38, %c0_39] : memref<4x1x32xf32, #tpu.memory_space<vmem>>, vector<1x1x32xf32>
    %80 = vector.shape_cast %79 : vector<1x1x32xf32> to vector<1x32xf32>
    %81 = vector.broadcast %80 : vector<1x32xf32> to vector<16x32xf32>
    %82 = arith.addf %77, %81 : vector<16x32xf32>
    %83 = arith.index_cast %c3_i32 : i32 to index
    %84 = memref.load %arg10[%83] : memref<4xf32, #tpu.memory_space<smem>>
    %cst_40 = arith.constant 0.000000e+00 : f32
    %85 = vector.broadcast %cst_40 : f32 to vector<16x32xf32>
    %86 = arith.maximumf %82, %85 : vector<16x32xf32>
    %87 = vector.broadcast %84 : f32 to vector<16x32xf32>
    %88 = arith.mulf %87, %86 : vector<16x32xf32>
    %89 = arith.addf %72, %88 : vector<16x32xf32>
    %c4_i32 = arith.constant 4 : i32
    %90 = arith.truncf %89 : vector<16x32xf32> to vector<16x32xbf16>
    %c0_41 = arith.constant 0 : index
    %c0_42 = arith.constant 0 : index
    %91 = vector.load %arg11[%c0_41, %c0_42] : memref<32x64xbf16, #tpu.memory_space<vmem>>, vector<32x64xbf16>
    %cst_43 = arith.constant dense<0.000000e+00> : vector<16x64xf32>
    %92 = tpu.matmul %90, %91, %cst_43 {dimension_numbers = #tpu.dot_dimension_numbers<[1], [0], [0], [1], [0, 0, 1, 1], [], []>} : vector<16x32xbf16>, vector<32x64xbf16>, vector<16x64xf32> -> vector<16x64xf32>
    %c0_44 = arith.constant 0 : index
    %c0_45 = arith.constant 0 : index
    %93 = vector.load %arg12[%c0_44, %c0_45] : memref<1x64xf32, #tpu.memory_space<vmem>>, vector<1x64xf32>
    %94 = vector.broadcast %93 : vector<1x64xf32> to vector<16x64xf32>
    %95 = arith.addf %92, %94 : vector<16x64xf32>
    %cst_46 = arith.constant 0.000000e+00 : f32
    %96 = vector.broadcast %cst_46 : f32 to vector<16x64xf32>
    %97 = arith.maximumf %95, %96 : vector<16x64xf32>
    %98 = arith.truncf %97 : vector<16x64xf32> to vector<16x64xbf16>
    %c0_47 = arith.constant 0 : index
    %c0_48 = arith.constant 0 : index
    %99 = vector.load %arg13[%c0_47, %c0_48] : memref<64x16xbf16, #tpu.memory_space<vmem>>, vector<64x16xbf16>
    %cst_49 = arith.constant dense<0.000000e+00> : vector<16x16xf32>
    %100 = tpu.matmul %98, %99, %cst_49 {dimension_numbers = #tpu.dot_dimension_numbers<[1], [0], [0], [1], [0, 0, 1, 1], [], []>} : vector<16x64xbf16>, vector<64x16xbf16>, vector<16x16xf32> -> vector<16x16xf32>
    %c0_50 = arith.constant 0 : index
    %c0_51 = arith.constant 0 : index
    %101 = vector.load %arg14[%c0_50, %c0_51] : memref<1x16xf32, #tpu.memory_space<vmem>>, vector<1x16xf32>
    %102 = vector.broadcast %101 : vector<1x16xf32> to vector<16x16xf32>
    %103 = arith.addf %100, %102 : vector<16x16xf32>
    %104 = math.tanh %103 : vector<16x16xf32>
    %cst_52 = arith.constant 1.000000e+00 : f32
    %105 = vector.broadcast %cst_52 : f32 to vector<16x16xf32>
    %106 = arith.mulf %105, %104 : vector<16x16xf32>
    %c0_53 = arith.constant 0 : index
    %c0_54 = arith.constant 0 : index
    %107 = vector.load %arg15[%c0_53, %c0_54] : memref<16x16xf32, #tpu.memory_space<vmem>>, vector<16x16xf32>
    tpu.vector_store %arg15[%c0_53, %c0_54], %106 {strides = array<i32>} : memref<16x16xf32, #tpu.memory_space<vmem>>, vector<16x16xf32>,
    return
  }
  func.func @transform_0(%arg0: i32) -> (i32, i32) {
    %c0_i32 = arith.constant 0 : i32
    %c0_i32_0 = arith.constant 0 : i32
    return %arg0, %c0_i32 : i32, i32
  }
  func.func @transform_1(%arg0: i32) -> (i32, i32) {
    %c0_i32 = arith.constant 0 : i32
    %c0_i32_0 = arith.constant 0 : i32
    return %arg0, %c0_i32 : i32, i32
  }
  func.func @transform_2(%arg0: i32) -> (i32, i32) {
    %c0_i32 = arith.constant 0 : i32
    %c0_i32_0 = arith.constant 0 : i32
    %c0_i32_1 = arith.constant 0 : i32
    return %c0_i32, %c0_i32_0 : i32, i32
  }
  func.func @transform_3(%arg0: i32) -> (i32, i32) {
    %c0_i32 = arith.constant 0 : i32
    %c0_i32_0 = arith.constant 0 : i32
    %c0_i32_1 = arith.constant 0 : i32
    return %c0_i32, %c0_i32_0 : i32, i32
  }
  func.func @transform_4(%arg0: i32) -> (i32, i32) {
    %c0_i32 = arith.constant 0 : i32
    %c0_i32_0 = arith.constant 0 : i32
    %c0_i32_1 = arith.constant 0 : i32
    return %c0_i32, %c0_i32_0 : i32, i32
  }
  func.func @transform_5(%arg0: i32) -> (i32, i32) {
    %c0_i32 = arith.constant 0 : i32
    %c0_i32_0 = arith.constant 0 : i32
    %c0_i32_1 = arith.constant 0 : i32
    return %c0_i32, %c0_i32_0 : i32, i32
  }
  func.func @transform_6(%arg0: i32) -> (i32, i32) {
    %c0_i32 = arith.constant 0 : i32
    %c0_i32_0 = arith.constant 0 : i32
    %c0_i32_1 = arith.constant 0 : i32
    return %c0_i32, %c0_i32_0 : i32, i32
  }
  func.func @transform_7(%arg0: i32) -> (i32, i32, i32) {
    %c0_i32 = arith.constant 0 : i32
    %c0_i32_0 = arith.constant 0 : i32
    %c0_i32_1 = arith.constant 0 : i32
    %c0_i32_2 = arith.constant 0 : i32
    return %c0_i32, %c0_i32_0, %c0_i32_1 : i32, i32, i32
  }
  func.func @transform_8(%arg0: i32) -> (i32, i32, i32) {
    %c0_i32 = arith.constant 0 : i32
    %c0_i32_0 = arith.constant 0 : i32
    %c0_i32_1 = arith.constant 0 : i32
    %c0_i32_2 = arith.constant 0 : i32
    return %c0_i32, %c0_i32_0, %c0_i32_1 : i32, i32, i32
  }
  func.func @transform_9(%arg0: i32) -> i32 {
    %c0_i32 = arith.constant 0 : i32
    %c0_i32_0 = arith.constant 0 : i32
    return %c0_i32 : i32
  }
  func.func @transform_10(%arg0: i32) -> (i32, i32) {
    %c0_i32 = arith.constant 0 : i32
    %c0_i32_0 = arith.constant 0 : i32
    %c0_i32_1 = arith.constant 0 : i32
    return %c0_i32, %c0_i32_0 : i32, i32
  }
  func.func @transform_11(%arg0: i32) -> (i32, i32) {
    %c0_i32 = arith.constant 0 : i32
    %c0_i32_0 = arith.constant 0 : i32
    %c0_i32_1 = arith.constant 0 : i32
    return %c0_i32, %c0_i32_0 : i32, i32
  }
  func.func @transform_12(%arg0: i32) -> (i32, i32) {
    %c0_i32 = arith.constant 0 : i32
    %c0_i32_0 = arith.constant 0 : i32
    %c0_i32_1 = arith.constant 0 : i32
    return %c0_i32, %c0_i32_0 : i32, i32
  }
  func.func @transform_13(%arg0: i32) -> (i32, i32) {
    %c0_i32 = arith.constant 0 : i32
    %c0_i32_0 = arith.constant 0 : i32
    %c0_i32_1 = arith.constant 0 : i32
    return %c0_i32, %c0_i32_0 : i32, i32
  }
  func.func @transform_14(%arg0: i32) -> (i32, i32) {
    %c0_i32 = arith.constant 0 : i32
    %c0_i32_0 = arith.constant 0 : i32
    return %arg0, %c0_i32 : i32, i32
  }
}

</mosaic_0001>

<llo_original>
// kernel: tpu_custom_call.1
$region0: #{tpu_custom_call.1}
  #allocation0 [shape = 'u32[]', space=smem, size = 0x4, offset = 0x4, fixed_abs, tag = 'smem constant byte address 0x4 - core index']
  #allocation1 [shape = 'u32[144,128]{1,0:T(1,128)}', space=vmem, size = 0x12000, scoped, tag = 'internal scratch']
  %s0 = inlined_call_operand.vmem [shape: f32[16,8], index: 0, kind: input, shape index: {}]
  %s1 = inlined_call_operand.vmem [shape: f32[16,8], index: 1, kind: input, shape index: {}]
  %s2 = inlined_call_operand.hbm [shape: bf16[8,32], index: 2, kind: input, shape index: {}]
  %s3 = inlined_call_operand.hbm [shape: f32[1,32], index: 3, kind: input, shape index: {}]
  %s4 = inlined_call_operand.vmem [shape: bf16[32,32], index: 4, kind: input, shape index: {}]
  %s5 = inlined_call_operand.hbm [shape: bf16[8,32], index: 5, kind: input, shape index: {}]
  %s6 = inlined_call_operand.hbm [shape: f32[1,32], index: 6, kind: input, shape index: {}]
  %s7 = inlined_call_operand.vmem [shape: bf16[4,32,32], index: 7, kind: input, shape index: {}]
  %s8 = inlined_call_operand.hbm [shape: f32[4,1,32], index: 8, kind: input, shape index: {}]
  %s9 = inlined_call_operand.hbm [shape: f32[4], index: 9, kind: input, shape index: {}]
  %s10 = inlined_call_operand.vmem [shape: bf16[32,64], index: 10, kind: input, shape index: {}]
  %s11 = inlined_call_operand.vmem [shape: f32[1,64], index: 11, kind: input, shape index: {}]
  %s12 = inlined_call_operand.vmem [shape: bf16[64,16], index: 12, kind: input, shape index: {}]
  %s13 = inlined_call_operand.vmem [shape: f32[1,16], index: 13, kind: input, shape index: {}]
  %s14 = inlined_call_operand.hbm [shape: f32[16,16], index: 14, kind: output, shape index: {}]
  %s15 = sld [smem:[#allocation0]]
  $region90: #{tpu_custom_call.1} parent=0
    _
  %s17 = ssub.s32 1, %s15
  %s18 = scalar_select 0, %s17, %s15
  $region1: #{tpu_custom_call.1} parent=0
    #allocation2 [shape = 'u8[2048]{0}', space=vmem, size = 0x800, scoped, tag = 'input window, operand 2, single buffered']
    #allocation3 [shape = 's32[1]{0}', space=sflag, size = 0x4, scoped, tag = 'scoped memory for tpu_custom_call.1']
    #allocation4 [shape = 's32[1]{0}', space=sflag, size = 0x4, scoped, tag = 'scoped memory for tpu_custom_call.1']
    #allocation5 [shape = 's32[1]{0}', space=sflag, size = 0x4, scoped, tag = 'scoped memory for tpu_custom_call.1']
    #allocation6 [shape = 'u8[512]{0}', space=vmem, size = 0x400, scoped, tag = 'input window, operand 3, single buffered']
    #allocation7 [shape = 's32[1]{0}', space=sflag, size = 0x4, scoped, tag = 'scoped memory for tpu_custom_call.1']
    #allocation8 [shape = 'u8[2048]{0}', space=vmem, size = 0x800, scoped, tag = 'input window, operand 5, single buffered']
    #allocation9 [shape = 'u8[512]{0}', space=vmem, size = 0x400, scoped, tag = 'input window, operand 6, single buffered']
    #allocation10 [shape = 's32[1]{0}', space=sflag, size = 0x4, scoped, tag = 'scoped memory for tpu_custom_call.1']
    #allocation11 [shape = 'u8[2048]{0}', space=vmem, size = 0x800, scoped, tag = 'input window, operand 8, single buffered']
    #allocation12 [shape = 'u8[512]{0}', space=smem, size = 0x200, scoped, tag = 'input window, operand 9, single buffered']
    #allocation13 [shape = 'u8[8192]{0}', space=vmem, size = 0x2000, scoped, tag = 'output window, operand 0, single buffered']
    %19 = vsyncpa [#allocation3], 0
    %20 = vsyncpa [#allocation7], 0
    %21 = vsyncpa [#allocation10], 0
    %22 = vsyncpa [#allocation5], 0
    %23 = vsyncpa [#allocation4], 0
    // Predicated region
    $region2: #{tpu_custom_call.1} parent=1 // pred_check
      _
    $region3: #{tpu_custom_call.1} parent=1 // pred_check_branch
      %25 = sbr.rel (0) target = $region5
    $region4: #{tpu_custom_call.1} parent=1 // pred_region
      _
    $region5: #{tpu_custom_call.1} parent=1 // pred_fallthru
      _
    // Predicated region
    $region6: #{tpu_custom_call.1} parent=1 // pred_check
      _
    $region7: #{tpu_custom_call.1} parent=1 // pred_check_branch
      %27 = sbr.rel (0) target = $region9
    $region8: #{tpu_custom_call.1} parent=1 // pred_region
      _
    $region9: #{tpu_custom_call.1} parent=1 // pred_fallthru
      _
    // Predicated region
    $region10: #{tpu_custom_call.1} parent=1 // pred_check
      _
    $region11: #{tpu_custom_call.1} parent=1 // pred_check_branch
      %29 = sbr.rel (0) target = $region13
    $region12: #{tpu_custom_call.1} parent=1 // pred_region
      %s31 = ssub.s32 64, 64
      %32 = vsyncadd [#allocation3], %s31
      %s34 = sshll.u32 [#allocation2], 4
      %s35 = int_to_ptr.vmem [resolvable:$true] %s34
      %37 = dma.hbm_to_vmem [thread:$0]  %s2, 64, %s35, [#allocation3]
    $region13: #{tpu_custom_call.1} parent=1 // pred_fallthru
      _
    // Predicated region
    $region14: #{tpu_custom_call.1} parent=1 // pred_check
      _
    $region15: #{tpu_custom_call.1} parent=1 // pred_check_branch
      %39 = sbr.rel (0) target = $region17
    $region16: #{tpu_custom_call.1} parent=1 // pred_region
      %s41 = ssub.s32 16, 16
      %42 = vsyncadd [#allocation7], %s41
      %s44 = sshll.u32 [#allocation6], 4
      %s45 = int_to_ptr.vmem [resolvable:$true] %s44
      %47 = dma.hbm_to_vmem [thread:$0]  %s3, 16, %s45, [#allocation7]
    $region17: #{tpu_custom_call.1} parent=1 // pred_fallthru
      _
    // Predicated region
    $region18: #{tpu_custom_call.1} parent=1 // pred_check
      _
    $region19: #{tpu_custom_call.1} parent=1 // pred_check_branch
      %49 = sbr.rel (0) target = $region21
    $region20: #{tpu_custom_call.1} parent=1 // pred_region
      _
    $region21: #{tpu_custom_call.1} parent=1 // pred_fallthru
      _
    // Predicated region
    $region22: #{tpu_custom_call.1} parent=1 // pred_check
      _
    $region23: #{tpu_custom_call.1} parent=1 // pred_check_branch
      %51 = sbr.rel (0) target = $region25
    $region24: #{tpu_custom_call.1} parent=1 // pred_region
      %s53 = ssub.s32 64, 64
      %54 = vsyncadd [#allocation7], %s53
      %s56 = sshll.u32 [#allocation8], 4
      %s57 = int_to_ptr.vmem [resolvable:$true] %s56
      %59 = dma.hbm_to_vmem [thread:$0]  %s5, 64, %s57, [#allocation7]
    $region25: #{tpu_custom_call.1} parent=1 // pred_fallthru
      _
    // Predicated region
    $region26: #{tpu_custom_call.1} parent=1 // pred_check
      _
    $region27: #{tpu_custom_call.1} parent=1 // pred_check_branch
      %61 = sbr.rel (0) target = $region29
    $region28: #{tpu_custom_call.1} parent=1 // pred_region
      %s63 = ssub.s32 16, 16
      %64 = vsyncadd [#allocation10], %s63
      %s66 = sshll.u32 [#allocation9], 4
      %s67 = int_to_ptr.vmem [resolvable:$true] %s66
      %69 = dma.hbm_to_vmem [thread:$0]  %s6, 16, %s67, [#allocation10]
    $region29: #{tpu_custom_call.1} parent=1 // pred_fallthru
      _
    // Predicated region
    $region30: #{tpu_custom_call.1} parent=1 // pred_check
      _
    $region31: #{tpu_custom_call.1} parent=1 // pred_check_branch
      %71 = sbr.rel (0) target = $region33
    $region32: #{tpu_custom_call.1} parent=1 // pred_region
      _
    $region33: #{tpu_custom_call.1} parent=1 // pred_fallthru
      _
    // Predicated region
    $region34: #{tpu_custom_call.1} parent=1 // pred_check
      _
    $region35: #{tpu_custom_call.1} parent=1 // pred_check_branch
      %73 = sbr.rel (0) target = $region37
    $region36: #{tpu_custom_call.1} parent=1 // pred_region
      %s75 = ssub.s32 64, 64
      %76 = vsyncadd [#allocation10], %s75
      %s77 = sshll.u32 [#allocation11], 4
      %s78 = int_to_ptr.vmem [resolvable:$true] %s77
      %83 = dma.hbm_to_vmem [thread:$0]  %s8, 64, %s78, [#allocation10], 16, 16, 1
    $region37: #{tpu_custom_call.1} parent=1 // pred_fallthru
      _
    // Predicated region
    $region38: #{tpu_custom_call.1} parent=1 // pred_check
      _
    $region39: #{tpu_custom_call.1} parent=1 // pred_check_branch
      %85 = sbr.rel (0) target = $region41
    $region40: #{tpu_custom_call.1} parent=1 // pred_region
      %s87 = ssub.s32 16, 16
      %88 = vsyncadd [#allocation5], %s87
      %91 = dma.hbm_to_smem %s9, 16, [#allocation12], [#allocation5]
    $region41: #{tpu_custom_call.1} parent=1 // pred_fallthru
      _
    // Predicated region
    $region42: #{tpu_custom_call.1} parent=1 // pred_check
      _
    $region43: #{tpu_custom_call.1} parent=1 // pred_check_branch
      %93 = sbr.rel (0) target = $region45
    $region44: #{tpu_custom_call.1} parent=1 // pred_region
      _
    $region45: #{tpu_custom_call.1} parent=1 // pred_fallthru
      _
    // Predicated region
    $region46: #{tpu_custom_call.1} parent=1 // pred_check
      _
    $region47: #{tpu_custom_call.1} parent=1 // pred_check_branch
      %95 = sbr.rel (0) target = $region49
    $region48: #{tpu_custom_call.1} parent=1 // pred_region
      _
    $region49: #{tpu_custom_call.1} parent=1 // pred_fallthru
      _
    // Predicated region
    $region50: #{tpu_custom_call.1} parent=1 // pred_check
      _
    $region51: #{tpu_custom_call.1} parent=1 // pred_check_branch
      %97 = sbr.rel (0) target = $region53
    $region52: #{tpu_custom_call.1} parent=1 // pred_region
      _
    $region53: #{tpu_custom_call.1} parent=1 // pred_fallthru
      _
    // Predicated region
    $region54: #{tpu_custom_call.1} parent=1 // pred_check
      _
    $region55: #{tpu_custom_call.1} parent=1 // pred_check_branch
      %99 = sbr.rel (0) target = $region57
    $region56: #{tpu_custom_call.1} parent=1 // pred_region
      _
    $region57: #{tpu_custom_call.1} parent=1 // pred_fallthru
      _
    // Predicated region
    $region58: #{tpu_custom_call.1} parent=1 // pred_check
      _
    $region59: #{tpu_custom_call.1} parent=1 // pred_check_branch
      %101 = sbr.rel (0) target = $region61
    $region60: #{tpu_custom_call.1} parent=1 // pred_region
      %102 = dma.done [#allocation3], 64
    $region61: #{tpu_custom_call.1} parent=1 // pred_fallthru
      _
    // Predicated region
    $region62: #{tpu_custom_call.1} parent=1 // pred_check
      _
    $region63: #{tpu_custom_call.1} parent=1 // pred_check_branch
      %104 = sbr.rel (0) target = $region65
    $region64: #{tpu_custom_call.1} parent=1 // pred_region
      %105 = dma.done [#allocation7], 16
    $region65: #{tpu_custom_call.1} parent=1 // pred_fallthru
      _
    // Predicated region
    $region66: #{tpu_custom_call.1} parent=1 // pred_check
      _
    $region67: #{tpu_custom_call.1} parent=1 // pred_check_branch
      %107 = sbr.rel (0) target = $region69
    $region68: #{tpu_custom_call.1} parent=1 // pred_region
      %108 = dma.done [#allocation7], 64
    $region69: #{tpu_custom_call.1} parent=1 // pred_fallthru
      _
    // Predicated region
    $region70: #{tpu_custom_call.1} parent=1 // pred_check
      _
    $region71: #{tpu_custom_call.1} parent=1 // pred_check_branch
      %110 = sbr.rel (0) target = $region73
    $region72: #{tpu_custom_call.1} parent=1 // pred_region
      %111 = dma.done [#allocation10], 16
    $region73: #{tpu_custom_call.1} parent=1 // pred_fallthru
      _
    // Predicated region
    $region74: #{tpu_custom_call.1} parent=1 // pred_check
      _
    $region75: #{tpu_custom_call.1} parent=1 // pred_check_branch
      %113 = sbr.rel (0) target = $region77
    $region76: #{tpu_custom_call.1} parent=1 // pred_region
      %114 = dma.done [#allocation10], 64
    $region77: #{tpu_custom_call.1} parent=1 // pred_fallthru
      _
    // Predicated region
    $region78: #{tpu_custom_call.1} parent=1 // pred_check
      _
    $region79: #{tpu_custom_call.1} parent=1 // pred_check_branch
      %116 = sbr.rel (0) target = $region81
    $region80: #{tpu_custom_call.1} parent=1 // pred_region
      %117 = dma.done [#allocation5], 16
    $region81: #{tpu_custom_call.1} parent=1 // pred_fallthru
      _
    %118 = sfence
    %v120 = vld [vmem:[%s1] sm:$0xff]
    %v121 = vld [vmem:[%s1 + $0x8] sm:$0xff]
    %v122 = vpack.c.bf16 %v121, %v120
    %v123 = vld [vmem:[#allocation2] sm:$0xf]
    %v124 = vld [vmem:[#allocation6] sm:$0x1]
    %v126 = vlaneseq
    %v127 = vshrl.u32 %v126, 7
    %v128 = vsub.s32 0, %v127
    %v129 = vrot.slane %v124, %v128
    %vm131 = vcmask 64512
    %v133 = vsel %vm131, %v122, 0
    %vm135 = vcmask 1043456
    %v137 = vsel %vm135, %v123, 0
    %139 = vmatprep.subr.bf16.mxu0 0
    %140 = vmatpush1.bf16.msra.mxu0 0
    %141 = vmatprep.subr.bf16.mxu0 0
    %142 = vmatpush1.bf16.msra.mxu0 0
    %143 = vmatprep.subr.bf16.mxu0 0
    %144 = vmatpush1.bf16.msra.mxu0 0
    %145 = vmatprep.subr.bf16.mxu0 0
    %146 = vmatpush1.bf16.msra.mxu0 0
    %147 = vmatprep.subr.bf16.mxu0 0
    %148 = vmatpush1.bf16.msra.mxu0 0
    %149 = vmatprep.subr.bf16.mxu0 0
    %150 = vmatpush1.bf16.msra.mxu0 0
    %151 = vmatprep.subr.bf16.mxu0 0
    %152 = vmatpush1.bf16.msra.mxu0 0
    %153 = vmatprep.subr.bf16.mxu0 0
    %154 = vmatpush1.bf16.msra.mxu0 %v137
    %155 = vmatprep.subr.bf16.mxu0 0
    %156 = vmatpush2.bf16.msra.mxu0 0
    %157 = vmatprep.subr.bf16.mxu0 0
    %158 = vmatpush2.bf16.msra.mxu0 0
    %159 = vmatprep.subr.bf16.mxu0 0
    %160 = vmatpush2.bf16.msra.mxu0 0
    %161 = vmatprep.subr.bf16.mxu0 0
    %162 = vmatpush2.bf16.msra.mxu0 0
    %163 = vmatprep.subr.bf16.mxu0 0
    %164 = vmatpush2.bf16.msra.mxu0 0
    %165 = vmatprep.subr.bf16.mxu0 0
    %166 = vmatpush2.bf16.msra.mxu0 0
    %167 = vmatprep.subr.bf16.mxu0 0
    %168 = vmatpush2.bf16.msra.mxu0 0
    %169 = vmatprep.subr.bf16.mxu0 0
    %170 = vmatpush2.bf16.msra.mxu0 0
    %171 = vmatprep.mubr.bf16.mxu0 0
    %172 = vmatmul.mubr.bf16.gmra.mxu0 %v133
    %v173 = vpop.f32.mrf.mxu0
    %v174 = vadd.f32 %v129, %v173
    %v175 = vpop.f32.mrf.mxu0
    %v176 = vpop.f32.mrf.mxu0
    %v177 = vadd.f32 %v129, %v176
    %v178 = vpop.f32.mrf.mxu0
    %179 = vdwg.mxu0
    %v180 = vmax.f32 %v174, 0.0
    %v181 = vmax.f32 %v177, 0.0
    %v182 = vpack.c.bf16 %v181, %v180
    %v183 = vld [vmem:[%s4] sm:$0xf]
    %v184 = vld [vmem:[%s4 + $0x4] sm:$0xf]
    %v185 = vld [vmem:[%s4 + $0x8] sm:$0xf]
    %v186 = vld [vmem:[%s4 + $0xc] sm:$0xf]
    %v187 = vld [vmem:[%s0] sm:$0xff]
    %v188 = vld [vmem:[%s0 + $0x8] sm:$0xff]
    %v189 = vpack.c.bf16 %v188, %v187
    %v190 = vld [vmem:[#allocation8] sm:$0xf]
    %v192 = vsel %vm131, %v189, 0
    %v195 = vsel %vm135, %v190, 0
    %197 = vmatprep.subr.bf16.mxu0 0
    %198 = vmatpush1.bf16.msra.mxu0 0
    %199 = vmatprep.subr.bf16.mxu0 0
    %200 = vmatpush1.bf16.msra.mxu0 0
    %201 = vmatprep.subr.bf16.mxu0 0
    %202 = vmatpush1.bf16.msra.mxu0 0
    %203 = vmatprep.subr.bf16.mxu0 0
    %204 = vmatpush1.bf16.msra.mxu0 0
    %205 = vmatprep.subr.bf16.mxu0 0
    %206 = vmatpush1.bf16.msra.mxu0 0
    %207 = vmatprep.subr.bf16.mxu0 0
    %208 = vmatpush1.bf16.msra.mxu0 0
    %209 = vmatprep.subr.bf16.mxu0 0
    %210 = vmatpush1.bf16.msra.mxu0 0
    %211 = vmatprep.subr.bf16.mxu0 0
    %212 = vmatpush1.bf16.msra.mxu0 %v195
    %213 = vmatprep.subr.bf16.mxu0 0
    %214 = vmatpush2.bf16.msra.mxu0 0
    %215 = vmatprep.subr.bf16.mxu0 0
    %216 = vmatpush2.bf16.msra.mxu0 0
    %217 = vmatprep.subr.bf16.mxu0 0
    %218 = vmatpush2.bf16.msra.mxu0 0
    %219 = vmatprep.subr.bf16.mxu0 0
    %220 = vmatpush2.bf16.msra.mxu0 0
    %221 = vmatprep.subr.bf16.mxu0 0
    %222 = vmatpush2.bf16.msra.mxu0 0
    %223 = vmatprep.subr.bf16.mxu0 0
    %224 = vmatpush2.bf16.msra.mxu0 0
    %225 = vmatprep.subr.bf16.mxu0 0
    %226 = vmatpush2.bf16.msra.mxu0 0
    %227 = vmatprep.subr.bf16.mxu0 0
    %228 = vmatpush2.bf16.msra.mxu0 0
    %229 = vmatprep.mubr.bf16.mxu0 0
    %230 = vmatmul.mubr.bf16.gmra.mxu0 %v192
    %v231 = vpop.f32.mrf.mxu0
    %v232 = vadd.f32 0.0, %v231
    %v233 = vpop.f32.mrf.mxu0
    %v234 = vpop.f32.mrf.mxu0
    %v235 = vadd.f32 0.0, %v234
    %v236 = vpop.f32.mrf.mxu0
    %237 = vdwg.mxu0
    %v242 = vunpack.c.l.b16 %v183
    %v243 = vunpack.c.l.b16 %v184
    %v244 = vunpack.c.l.b16 %v185
    %v245 = vunpack.c.l.b16 %v186
    %v246 = vpack.c.b16 %v243, %v242
    %v247 = vpack.c.b16 %v245, %v244
    %vm250 = vcmask 261120
    %v252 = vsel %vm250, %v182, 0
    %254 = vmatprep.subr.bf16.mxu0 0
    %255 = vmatpush1.bf16.msra.mxu0 0
    %256 = vmatprep.subr.bf16.mxu0 0
    %257 = vmatpush1.bf16.msra.mxu0 0
    %258 = vmatprep.subr.bf16.mxu0 0
    %259 = vmatpush1.bf16.msra.mxu0 0
    %260 = vmatprep.subr.bf16.mxu0 0
    %261 = vmatpush1.bf16.msra.mxu0 0
    %262 = vmatprep.subr.bf16.mxu0 0
    %263 = vmatpush1.bf16.msra.mxu0 0
    %264 = vmatprep.subr.bf16.mxu0 0
    %265 = vmatpush1.bf16.msra.mxu0 0
    %266 = vmatprep.subr.bf16.mxu0 0
    %267 = vmatpush1.bf16.msra.mxu0 %v247
    %268 = vmatprep.subr.bf16.mxu0 0
    %269 = vmatpush1.bf16.msra.mxu0 %v246
    %270 = vmatprep.subr.bf16.mxu0 0
    %271 = vmatpush2.bf16.msra.mxu0 0
    %272 = vmatprep.subr.bf16.mxu0 0
    %273 = vmatpush2.bf16.msra.mxu0 0
    %274 = vmatprep.subr.bf16.mxu0 0
    %275 = vmatpush2.bf16.msra.mxu0 0
    %276 = vmatprep.subr.bf16.mxu0 0
    %277 = vmatpush2.bf16.msra.mxu0 0
    %278 = vmatprep.subr.bf16.mxu0 0
    %279 = vmatpush2.bf16.msra.mxu0 0
    %280 = vmatprep.subr.bf16.mxu0 0
    %281 = vmatpush2.bf16.msra.mxu0 0
    %282 = vmatprep.subr.bf16.mxu0 0
    %283 = vmatpush2.bf16.msra.mxu0 0
    %284 = vmatprep.subr.bf16.mxu0 0
    %285 = vmatpush2.bf16.msra.mxu0 0
    %286 = vmatprep.mubr.bf16.mxu0 0
    %287 = vmatmul.mubr.bf16.gmra.mxu0 %v252
    %v288 = vpop.f32.mrf.mxu0
    %v289 = vadd.f32 %v232, %v288
    %v290 = vpop.f32.mrf.mxu0
    %v291 = vpop.f32.mrf.mxu0
    %v292 = vadd.f32 %v235, %v291
    %v293 = vpop.f32.mrf.mxu0
    %294 = vdwg.mxu0
    %v295 = vld [vmem:[#allocation9] sm:$0x1]
    %v297 = vlaneseq
    %v298 = vshrl.u32 %v297, 7
    %v299 = vsub.s32 0, %v298
    %v300 = vrot.slane %v295, %v299
    %v302 = vadd.f32 %v289, %v300
    %v303 = vadd.f32 %v292, %v300
    %v304 = vmax.f32 %v302, 0.0
    %v305 = vmax.f32 %v303, 0.0
    %v306 = vpack.c.bf16 %v305, %v304
    %v307 = vld [vmem:[%s7] sm:$0xf]
    %v308 = vld [vmem:[%s7 + $0x4] sm:$0xf]
    %v309 = vld [vmem:[%s7 + $0x8] sm:$0xf]
    %v310 = vld [vmem:[%s7 + $0xc] sm:$0xf]
    %v311 = vld [vmem:[#allocation11] sm:$0x1]
    %v313 = vlaneseq
    %v314 = vshrl.u32 %v313, 7
    %v315 = vsub.s32 0, %v314
    %v316 = vrot.slane %v311, %v315
    %v322 = vunpack.c.l.b16 %v307
    %v323 = vunpack.c.l.b16 %v308
    %v324 = vunpack.c.l.b16 %v309
    %v325 = vunpack.c.l.b16 %v310
    %v326 = vpack.c.b16 %v323, %v322
    %v327 = vpack.c.b16 %v325, %v324
    %v331 = vsel %vm250, %v306, 0
    %333 = vmatprep.subr.bf16.mxu0 0
    %334 = vmatpush1.bf16.msra.mxu0 0
    %335 = vmatprep.subr.bf16.mxu0 0
    %336 = vmatpush1.bf16.msra.mxu0 0
    %337 = vmatprep.subr.bf16.mxu0 0
    %338 = vmatpush1.bf16.msra.mxu0 0
    %339 = vmatprep.subr.bf16.mxu0 0
    %340 = vmatpush1.bf16.msra.mxu0 0
    %341 = vmatprep.subr.bf16.mxu0 0
    %342 = vmatpush1.bf16.msra.mxu0 0
    %343 = vmatprep.subr.bf16.mxu0 0
    %344 = vmatpush1.bf16.msra.mxu0 0
    %345 = vmatprep.subr.bf16.mxu0 0
    %346 = vmatpush1.bf16.msra.mxu0 %v327
    %347 = vmatprep.subr.bf16.mxu0 0
    %348 = vmatpush1.bf16.msra.mxu0 %v326
    %349 = vmatprep.subr.bf16.mxu0 0
    %350 = vmatpush2.bf16.msra.mxu0 0
    %351 = vmatprep.subr.bf16.mxu0 0
    %352 = vmatpush2.bf16.msra.mxu0 0
    %353 = vmatprep.subr.bf16.mxu0 0
    %354 = vmatpush2.bf16.msra.mxu0 0
    %355 = vmatprep.subr.bf16.mxu0 0
    %356 = vmatpush2.bf16.msra.mxu0 0
    %357 = vmatprep.subr.bf16.mxu0 0
    %358 = vmatpush2.bf16.msra.mxu0 0
    %359 = vmatprep.subr.bf16.mxu0 0
    %360 = vmatpush2.bf16.msra.mxu0 0
    %361 = vmatprep.subr.bf16.mxu0 0
    %362 = vmatpush2.bf16.msra.mxu0 0
    %363 = vmatprep.subr.bf16.mxu0 0
    %364 = vmatpush2.bf16.msra.mxu0 0
    %365 = vmatprep.mubr.bf16.mxu0 0
    %366 = vmatmul.mubr.bf16.gmra.mxu0 %v331
    %v367 = vpop.f32.mrf.mxu0
    %v368 = vadd.f32 %v316, %v367
    %v369 = vpop.f32.mrf.mxu0
    %v370 = vpop.f32.mrf.mxu0
    %v371 = vadd.f32 %v316, %v370
    %v372 = vpop.f32.mrf.mxu0
    %373 = vdwg.mxu0
    %s374 = sld [smem:[#allocation12]]
    %v375 = vmax.f32 %v368, 0.0
    %v376 = vmax.f32 %v371, 0.0
    %v377 = vstv %s374
    %v378 = vmul.f32 %v377, %v375
    %v379 = vmul.f32 %v377, %v376
    %v380 = vadd.f32 %v304, %v378
    %v381 = vadd.f32 %v305, %v379
    %v382 = vpack.c.bf16 %v381, %v380
    %s383 = scalar_lea.vmem %s7, 16
    %v384 = vld [vmem:[%s383] sm:$0xf]
    %v385 = vld [vmem:[%s383 + $0x4] sm:$0xf]
    %v386 = vld [vmem:[%s383 + $0x8] sm:$0xf]
    %v387 = vld [vmem:[%s383 + $0xc] sm:$0xf]
    %s388 = scalar_lea.vmem [#allocation11], 1
    %v389 = vld [vmem:[%s388] sm:$0x1]
    %v391 = vlaneseq
    %v392 = vshrl.u32 %v391, 7
    %v393 = vsub.s32 0, %v392
    %v394 = vrot.slane %v389, %v393
    %v400 = vunpack.c.l.b16 %v384
    %v401 = vunpack.c.l.b16 %v385
    %v402 = vunpack.c.l.b16 %v386
    %v403 = vunpack.c.l.b16 %v387
    %v404 = vpack.c.b16 %v401, %v400
    %v405 = vpack.c.b16 %v403, %v402
    %v409 = vsel %vm250, %v382, 0
    %411 = vmatprep.subr.bf16.mxu0 0
    %412 = vmatpush1.bf16.msra.mxu0 0
    %413 = vmatprep.subr.bf16.mxu0 0
    %414 = vmatpush1.bf16.msra.mxu0 0
    %415 = vmatprep.subr.bf16.mxu0 0
    %416 = vmatpush1.bf16.msra.mxu0 0
    %417 = vmatprep.subr.bf16.mxu0 0
    %418 = vmatpush1.bf16.msra.mxu0 0
    %419 = vmatprep.subr.bf16.mxu0 0
    %420 = vmatpush1.bf16.msra.mxu0 0
    %421 = vmatprep.subr.bf16.mxu0 0
    %422 = vmatpush1.bf16.msra.mxu0 0
    %423 = vmatprep.subr.bf16.mxu0 0
    %424 = vmatpush1.bf16.msra.mxu0 %v405
    %425 = vmatprep.subr.bf16.mxu0 0
    %426 = vmatpush1.bf16.msra.mxu0 %v404
    %427 = vmatprep.subr.bf16.mxu0 0
    %428 = vmatpush2.bf16.msra.mxu0 0
    %429 = vmatprep.subr.bf16.mxu0 0
    %430 = vmatpush2.bf16.msra.mxu0 0
    %431 = vmatprep.subr.bf16.mxu0 0
    %432 = vmatpush2.bf16.msra.mxu0 0
    %433 = vmatprep.subr.bf16.mxu0 0
    %434 = vmatpush2.bf16.msra.mxu0 0
    %435 = vmatprep.subr.bf16.mxu0 0
    %436 = vmatpush2.bf16.msra.mxu0 0
    %437 = vmatprep.subr.bf16.mxu0 0
    %438 = vmatpush2.bf16.msra.mxu0 0
    %439 = vmatprep.subr.bf16.mxu0 0
    %440 = vmatpush2.bf16.msra.mxu0 0
    %441 = vmatprep.subr.bf16.mxu0 0
    %442 = vmatpush2.bf16.msra.mxu0 0
    %443 = vmatprep.mubr.bf16.mxu0 0
    %444 = vmatmul.mubr.bf16.gmra.mxu0 %v409
    %v445 = vpop.f32.mrf.mxu0
    %v446 = vadd.f32 %v394, %v445
    %v447 = vpop.f32.mrf.mxu0
    %v448 = vpop.f32.mrf.mxu0
    %v449 = vadd.f32 %v394, %v448
    %v450 = vpop.f32.mrf.mxu0
    %451 = vdwg.mxu0
    %s452 = sld [smem:[#allocation12 + $0x1]]
    %v453 = vmax.f32 %v446, 0.0
    %v454 = vmax.f32 %v449, 0.0
    %v455 = vstv %s452
    %v456 = vmul.f32 %v455, %v453
    %v457 = vmul.f32 %v455, %v454
    %v458 = vadd.f32 %v380, %v456
    %v459 = vadd.f32 %v381, %v457
    %v460 = vpack.c.bf16 %v459, %v458
    %s461 = scalar_lea.vmem %s7, 32
    %v462 = vld [vmem:[%s461] sm:$0xf]
    %v463 = vld [vmem:[%s461 + $0x4] sm:$0xf]
    %v464 = vld [vmem:[%s461 + $0x8] sm:$0xf]
    %v465 = vld [vmem:[%s461 + $0xc] sm:$0xf]
    %s466 = scalar_lea.vmem [#allocation11], 2
    %v467 = vld [vmem:[%s466] sm:$0x1]
    %v469 = vlaneseq
    %v470 = vshrl.u32 %v469, 7
    %v471 = vsub.s32 0, %v470
    %v472 = vrot.slane %v467, %v471
    %v478 = vunpack.c.l.b16 %v462
    %v479 = vunpack.c.l.b16 %v463
    %v480 = vunpack.c.l.b16 %v464
    %v481 = vunpack.c.l.b16 %v465
    %v482 = vpack.c.b16 %v479, %v478
    %v483 = vpack.c.b16 %v481, %v480
    %v487 = vsel %vm250, %v460, 0
    %489 = vmatprep.subr.bf16.mxu0 0
    %490 = vmatpush1.bf16.msra.mxu0 0
    %491 = vmatprep.subr.bf16.mxu0 0
    %492 = vmatpush1.bf16.msra.mxu0 0
    %493 = vmatprep.subr.bf16.mxu0 0
    %494 = vmatpush1.bf16.msra.mxu0 0
    %495 = vmatprep.subr.bf16.mxu0 0
    %496 = vmatpush1.bf16.msra.mxu0 0
    %497 = vmatprep.subr.bf16.mxu0 0
    %498 = vmatpush1.bf16.msra.mxu0 0
    %499 = vmatprep.subr.bf16.mxu0 0
    %500 = vmatpush1.bf16.msra.mxu0 0
    %501 = vmatprep.subr.bf16.mxu0 0
    %502 = vmatpush1.bf16.msra.mxu0 %v483
    %503 = vmatprep.subr.bf16.mxu0 0
    %504 = vmatpush1.bf16.msra.mxu0 %v482
    %505 = vmatprep.subr.bf16.mxu0 0
    %506 = vmatpush2.bf16.msra.mxu0 0
    %507 = vmatprep.subr.bf16.mxu0 0
    %508 = vmatpush2.bf16.msra.mxu0 0
    %509 = vmatprep.subr.bf16.mxu0 0
    %510 = vmatpush2.bf16.msra.mxu0 0
    %511 = vmatprep.subr.bf16.mxu0 0
    %512 = vmatpush2.bf16.msra.mxu0 0
    %513 = vmatprep.subr.bf16.mxu0 0
    %514 = vmatpush2.bf16.msra.mxu0 0
    %515 = vmatprep.subr.bf16.mxu0 0
    %516 = vmatpush2.bf16.msra.mxu0 0
    %517 = vmatprep.subr.bf16.mxu0 0
    %518 = vmatpush2.bf16.msra.mxu0 0
    %519 = vmatprep.subr.bf16.mxu0 0
    %520 = vmatpush2.bf16.msra.mxu0 0
    %521 = vmatprep.mubr.bf16.mxu0 0
    %522 = vmatmul.mubr.bf16.gmra.mxu0 %v487
    %v523 = vpop.f32.mrf.mxu0
    %v524 = vadd.f32 %v472, %v523
    %v525 = vpop.f32.mrf.mxu0
    %v526 = vpop.f32.mrf.mxu0
    %v527 = vadd.f32 %v472, %v526
    %v528 = vpop.f32.mrf.mxu0
    %529 = vdwg.mxu0
    %s530 = sld [smem:[#allocation12 + $0x2]]
    %v531 = vmax.f32 %v524, 0.0
    %v532 = vmax.f32 %v527, 0.0
    %v533 = vstv %s530
    %v534 = vmul.f32 %v533, %v531
    %v535 = vmul.f32 %v533, %v532
    %v536 = vadd.f32 %v458, %v534
    %v537 = vadd.f32 %v459, %v535
    %v538 = vpack.c.bf16 %v537, %v536
    %s539 = scalar_lea.vmem %s7, 48
    %v540 = vld [vmem:[%s539] sm:$0xf]
    %v541 = vld [vmem:[%s539 + $0x4] sm:$0xf]
    %v542 = vld [vmem:[%s539 + $0x8] sm:$0xf]
    %v543 = vld [vmem:[%s539 + $0xc] sm:$0xf]
    %s544 = scalar_lea.vmem [#allocation11], 3
    %v545 = vld [vmem:[%s544] sm:$0x1]
    %v547 = vlaneseq
    %v548 = vshrl.u32 %v547, 7
    %v549 = vsub.s32 0, %v548
    %v550 = vrot.slane %v545, %v549
    %v556 = vunpack.c.l.b16 %v540
    %v557 = vunpack.c.l.b16 %v541
    %v558 = vunpack.c.l.b16 %v542
    %v559 = vunpack.c.l.b16 %v543
    %v560 = vpack.c.b16 %v557, %v556
    %v561 = vpack.c.b16 %v559, %v558
    %v565 = vsel %vm250, %v538, 0
    %567 = vmatprep.subr.bf16.mxu0 0
    %568 = vmatpush1.bf16.msra.mxu0 0
    %569 = vmatprep.subr.bf16.mxu0 0
    %570 = vmatpush1.bf16.msra.mxu0 0
    %571 = vmatprep.subr.bf16.mxu0 0
    %572 = vmatpush1.bf16.msra.mxu0 0
    %573 = vmatprep.subr.bf16.mxu0 0
    %574 = vmatpush1.bf16.msra.mxu0 0
    %575 = vmatprep.subr.bf16.mxu0 0
    %576 = vmatpush1.bf16.msra.mxu0 0
    %577 = vmatprep.subr.bf16.mxu0 0
    %578 = vmatpush1.bf16.msra.mxu0 0
    %579 = vmatprep.subr.bf16.mxu0 0
    %580 = vmatpush1.bf16.msra.mxu0 %v561
    %581 = vmatprep.subr.bf16.mxu0 0
    %582 = vmatpush1.bf16.msra.mxu0 %v560
    %583 = vmatprep.subr.bf16.mxu0 0
    %584 = vmatpush2.bf16.msra.mxu0 0
    %585 = vmatprep.subr.bf16.mxu0 0
    %586 = vmatpush2.bf16.msra.mxu0 0
    %587 = vmatprep.subr.bf16.mxu0 0
    %588 = vmatpush2.bf16.msra.mxu0 0
    %589 = vmatprep.subr.bf16.mxu0 0
    %590 = vmatpush2.bf16.msra.mxu0 0
    %591 = vmatprep.subr.bf16.mxu0 0
    %592 = vmatpush2.bf16.msra.mxu0 0
    %593 = vmatprep.subr.bf16.mxu0 0
    %594 = vmatpush2.bf16.msra.mxu0 0
    %595 = vmatprep.subr.bf16.mxu0 0
    %596 = vmatpush2.bf16.msra.mxu0 0
    %597 = vmatprep.subr.bf16.mxu0 0
    %598 = vmatpush2.bf16.msra.mxu0 0
    %599 = vmatprep.mubr.bf16.mxu0 0
    %600 = vmatmul.mubr.bf16.gmra.mxu0 %v565
    %v601 = vpop.f32.mrf.mxu0
    %v602 = vadd.f32 %v550, %v601
    %v603 = vpop.f32.mrf.mxu0
    %v604 = vpop.f32.mrf.mxu0
    %v605 = vadd.f32 %v550, %v604
    %v606 = vpop.f32.mrf.mxu0
    %607 = vdwg.mxu0
    %s608 = sld [smem:[#allocation12 + $0x3]]
    %v609 = vmax.f32 %v602, 0.0
    %v610 = vmax.f32 %v605, 0.0
    %v611 = vstv %s608
    %v612 = vmul.f32 %v611, %v609
    %v613 = vmul.f32 %v611, %v610
    %v614 = vadd.f32 %v536, %v612
    %v615 = vadd.f32 %v537, %v613
    %v616 = vpack.c.bf16 %v615, %v614
    %v617 = vld [vmem:[%s10] sm:$0xf]
    %v618 = vld [vmem:[%s10 + $0x4] sm:$0xf]
    %v619 = vld [vmem:[%s10 + $0x8] sm:$0xf]
    %v620 = vld [vmem:[%s10 + $0xc] sm:$0xf]
    %v621 = vld [vmem:[%s11] sm:$0x1]
    %v623 = vlaneseq
    %v624 = vshrl.u32 %v623, 7
    %v625 = vsub.s32 0, %v624
    %v626 = vrot.slane %v621, %v625
    %v632 = vunpack.c.l.b16 %v617
    %v633 = vunpack.c.l.b16 %v618
    %v634 = vunpack.c.l.b16 %v619
    %v635 = vunpack.c.l.b16 %v620
    %v636 = vpack.c.b16 %v633, %v632
    %v637 = vpack.c.b16 %v635, %v634
    %v641 = vsel %vm250, %v616, 0
    %643 = vmatprep.subr.bf16.mxu0 0
    %644 = vmatpush1.bf16.msra.mxu0 0
    %645 = vmatprep.subr.bf16.mxu0 0
    %646 = vmatpush1.bf16.msra.mxu0 0
    %647 = vmatprep.subr.bf16.mxu0 0
    %648 = vmatpush1.bf16.msra.mxu0 0
    %649 = vmatprep.subr.bf16.mxu0 0
    %650 = vmatpush1.bf16.msra.mxu0 0
    %651 = vmatprep.subr.bf16.mxu0 0
    %652 = vmatpush1.bf16.msra.mxu0 0
    %653 = vmatprep.subr.bf16.mxu0 0
    %654 = vmatpush1.bf16.msra.mxu0 0
    %655 = vmatprep.subr.bf16.mxu0 0
    %656 = vmatpush1.bf16.msra.mxu0 %v637
    %657 = vmatprep.subr.bf16.mxu0 0
    %658 = vmatpush1.bf16.msra.mxu0 %v636
    %659 = vmatprep.subr.bf16.mxu0 0
    %660 = vmatpush2.bf16.msra.mxu0 0
    %661 = vmatprep.subr.bf16.mxu0 0
    %662 = vmatpush2.bf16.msra.mxu0 0
    %663 = vmatprep.subr.bf16.mxu0 0
    %664 = vmatpush2.bf16.msra.mxu0 0
    %665 = vmatprep.subr.bf16.mxu0 0
    %666 = vmatpush2.bf16.msra.mxu0 0
    %667 = vmatprep.subr.bf16.mxu0 0
    %668 = vmatpush2.bf16.msra.mxu0 0
    %669 = vmatprep.subr.bf16.mxu0 0
    %670 = vmatpush2.bf16.msra.mxu0 0
    %671 = vmatprep.subr.bf16.mxu0 0
    %672 = vmatpush2.bf16.msra.mxu0 0
    %673 = vmatprep.subr.bf16.mxu0 0
    %674 = vmatpush2.bf16.msra.mxu0 0
    %675 = vmatprep.mubr.bf16.mxu0 0
    %676 = vmatmul.mubr.bf16.gmra.mxu0 %v641
    %v677 = vpop.f32.mrf.mxu0
    %v678 = vadd.f32 %v626, %v677
    %v679 = vpop.f32.mrf.mxu0
    %v680 = vpop.f32.mrf.mxu0
    %v681 = vadd.f32 %v626, %v680
    %v682 = vpop.f32.mrf.mxu0
    %683 = vdwg.mxu0
    %v684 = vmax.f32 %v678, 0.0
    %v685 = vmax.f32 %v681, 0.0
    %v686 = vpack.c.bf16 %v685, %v684
    %v687 = vld [vmem:[%s12] sm:$0xf]
    %v688 = vld [vmem:[%s12 + $0x4] sm:$0xf]
    %v689 = vld [vmem:[%s12 + $0x8] sm:$0xf]
    %v690 = vld [vmem:[%s12 + $0xc] sm:$0xf]
    %v691 = vld [vmem:[%s12 + $0x10] sm:$0xf]
    %v692 = vld [vmem:[%s12 + $0x14] sm:$0xf]
    %v693 = vld [vmem:[%s12 + $0x18] sm:$0xf]
    %v694 = vld [vmem:[%s12 + $0x1c] sm:$0xf]
    %v695 = vld [vmem:[%s13] sm:$0x1]
    %v697 = vlaneseq
    %v698 = vshrl.u32 %v697, 7
    %v699 = vsub.s32 0, %v698
    %v700 = vrot.slane %v695, %v699
    %v710 = vunpack.c.l.b16 %v687
    %v711 = vunpack.c.l.b16 %v688
    %v712 = vunpack.c.l.b16 %v689
    %v713 = vunpack.c.l.b16 %v690
    %v714 = vunpack.c.l.b16 %v691
    %v715 = vunpack.c.l.b16 %v692
    %v716 = vunpack.c.l.b16 %v693
    %v717 = vunpack.c.l.b16 %v694
    %v718 = vpack.c.b16 %v711, %v710
    %v719 = vpack.c.b16 %v713, %v712
    %v720 = vpack.c.b16 %v715, %v714
    %v721 = vpack.c.b16 %v717, %v716
    %vm726 = vcmask 523264
    %v728 = vsel %vm726, %v686, 0
    %730 = vmatprep.subr.bf16.mxu0 0
    %731 = vmatpush1.bf16.msra.mxu0 0
    %732 = vmatprep.subr.bf16.mxu0 0
    %733 = vmatpush1.bf16.msra.mxu0 0
    %734 = vmatprep.subr.bf16.mxu0 0
    %735 = vmatpush1.bf16.msra.mxu0 0
    %736 = vmatprep.subr.bf16.mxu0 0
    %737 = vmatpush1.bf16.msra.mxu0 0
    %738 = vmatprep.subr.bf16.mxu0 0
    %739 = vmatpush1.bf16.msra.mxu0 %v721
    %740 = vmatprep.subr.bf16.mxu0 0
    %741 = vmatpush1.bf16.msra.mxu0 %v720
    %742 = vmatprep.subr.bf16.mxu0 0
    %743 = vmatpush1.bf16.msra.mxu0 %v719
    %744 = vmatprep.subr.bf16.mxu0 0
    %745 = vmatpush1.bf16.msra.mxu0 %v718
    %746 = vmatprep.subr.bf16.mxu0 0
    %747 = vmatpush2.bf16.msra.mxu0 0
    %748 = vmatprep.subr.bf16.mxu0 0
    %749 = vmatpush2.bf16.msra.mxu0 0
    %750 = vmatprep.subr.bf16.mxu0 0
    %751 = vmatpush2.bf16.msra.mxu0 0
    %752 = vmatprep.subr.bf16.mxu0 0
    %753 = vmatpush2.bf16.msra.mxu0 0
    %754 = vmatprep.subr.bf16.mxu0 0
    %755 = vmatpush2.bf16.msra.mxu0 0
    %756 = vmatprep.subr.bf16.mxu0 0
    %757 = vmatpush2.bf16.msra.mxu0 0
    %758 = vmatprep.subr.bf16.mxu0 0
    %759 = vmatpush2.bf16.msra.mxu0 0
    %760 = vmatprep.subr.bf16.mxu0 0
    %761 = vmatpush2.bf16.msra.mxu0 0
    %762 = vmatprep.mubr.bf16.mxu0 0
    %763 = vmatmul.mubr.bf16.gmra.mxu0 %v728
    %v764 = vpop.f32.mrf.mxu0
    %v765 = vadd.f32 %v700, %v764
    %v766 = vpop.f32.mrf.mxu0
    %v767 = vpop.f32.mrf.mxu0
    %v768 = vadd.f32 %v700, %v767
    %v769 = vpop.f32.mrf.mxu0
    %770 = vdwg.mxu0
    %v771 = vtanh.pop %v765
    %v772 = vtanh.pop %v768
    %vm773 = vcmask 130048
    %774 = vst.msk [vmem:[#allocation13] sm:$0xff] %vm773, %v771
    %775 = vst.msk [vmem:[#allocation13 + $0x8] sm:$0xff] %vm773, %v772
    // Predicated region
    $region82: #{tpu_custom_call.1} parent=1 // pred_check
      _
    $region83: #{tpu_custom_call.1} parent=1 // pred_check_branch
      %777 = sbr.rel (0) target = $region85
    $region84: #{tpu_custom_call.1} parent=1 // pred_region
      %s779 = ssub.s32 256, 256
      %780 = vsyncadd [#allocation4], %s779
      %s781 = sshll.u32 [#allocation13], 4
      %s782 = int_to_ptr.vmem [resolvable:$true] %s781
      %787 = dma.vmem_to_hbm [thread:$0]  %s782, 256, %s14, [#allocation4], 128, 128, 8
    $region85: #{tpu_custom_call.1} parent=1 // pred_fallthru
      _
    // Predicated region
    $region86: #{tpu_custom_call.1} parent=1 // pred_check
      _
    $region87: #{tpu_custom_call.1} parent=1 // pred_check_branch
      %789 = sbr.rel (0) target = $region89
    $region88: #{tpu_custom_call.1} parent=1 // pred_region
      %790 = dma.done [#allocation4], 256
    $region89: #{tpu_custom_call.1} parent=1 // pred_fallthru
      _
    %791 = vsyncpa [#allocation3], 1
    %792 = vsyncpa [#allocation7], 1
    %793 = vsyncpa [#allocation10], 1
    %794 = vsyncpa [#allocation4], 1
    %795 = vsyncpa [#allocation5], 1

// kernel: tpu_custom_call.1
$region0: #{tpu_custom_call.1}
  #allocation0 [shape = 'u32[]', space=smem, size = 0x4, offset = 0x4, fixed_abs, tag = 'smem constant byte address 0x4 - core index']
  #allocation1 [shape = 'u32[144,128]{1,0:T(1,128)}', space=vmem, size = 0x12000, scoped, tag = 'internal scratch']
  %s0 = inlined_call_operand.vmem [shape: f32[16,8], index: 0, kind: input, shape index: {}]
  %s1 = inlined_call_operand.vmem [shape: f32[16,8], index: 1, kind: input, shape index: {}]
  %s2 = inlined_call_operand.hbm [shape: bf16[8,32], index: 2, kind: input, shape index: {}]
  %s3 = inlined_call_operand.hbm [shape: f32[1,32], index: 3, kind: input, shape index: {}]
  %s4 = inlined_call_operand.vmem [shape: bf16[32,32], index: 4, kind: input, shape index: {}]
  %s5 = inlined_call_operand.hbm [shape: bf16[8,32], index: 5, kind: input, shape index: {}]
  %s6 = inlined_call_operand.hbm [shape: f32[1,32], index: 6, kind: input, shape index: {}]
  %s7 = inlined_call_operand.vmem [shape: bf16[4,32,32], index: 7, kind: input, shape index: {}]
  %s8 = inlined_call_operand.hbm [shape: f32[4,1,32], index: 8, kind: input, shape index: {}]
  %s9 = inlined_call_operand.hbm [shape: f32[4], index: 9, kind: input, shape index: {}]
  %s10 = inlined_call_operand.vmem [shape: bf16[32,64], index: 10, kind: input, shape index: {}]
  %s11 = inlined_call_operand.vmem [shape: f32[1,64], index: 11, kind: input, shape index: {}]
  %s12 = inlined_call_operand.vmem [shape: bf16[64,16], index: 12, kind: input, shape index: {}]
  %s13 = inlined_call_operand.vmem [shape: f32[1,16], index: 13, kind: input, shape index: {}]
  %s14 = inlined_call_operand.hbm [shape: f32[16,16], index: 14, kind: output, shape index: {}]
  %s15 = sld [smem:[#allocation0]]
  $region90: #{tpu_custom_call.1} parent=0
    _
  %s17 = ssub.s32 1, %s15
  %s18 = scalar_select 0, %s17, %s15
  $region1: #{tpu_custom_call.1} parent=0
    #allocation2 [shape = 'u8[2048]{0}', space=vmem, size = 0x800, scoped, tag = 'input window, operand 2, single buffered']
    #allocation3 [shape = 's32[1]{0}', space=sflag, size = 0x4, scoped, tag = 'scoped memory for tpu_custom_call.1']
    #allocation4 [shape = 's32[1]{0}', space=sflag, size = 0x4, scoped, tag = 'scoped memory for tpu_custom_call.1']
    #allocation5 [shape = 's32[1]{0}', space=sflag, size = 0x4, scoped, tag = 'scoped memory for tpu_custom_call.1']
    #allocation6 [shape = 'u8[512]{0}', space=vmem, size = 0x400, scoped, tag = 'input window, operand 3, single buffered']
    #allocation7 [shape = 's32[1]{0}', space=sflag, size = 0x4, scoped, tag = 'scoped memory for tpu_custom_call.1']
    #allocation8 [shape = 'u8[2048]{0}', space=vmem, size = 0x800, scoped, tag = 'input window, operand 5, single buffered']
    #allocation9 [shape = 'u8[512]{0}', space=vmem, size = 0x400, scoped, tag = 'input window, operand 6, single buffered']
    #allocation10 [shape = 's32[1]{0}', space=sflag, size = 0x4, scoped, tag = 'scoped memory for tpu_custom_call.1']
    #allocation11 [shape = 'u8[2048]{0}', space=vmem, size = 0x800, scoped, tag = 'input window, operand 8, single buffered']
    #allocation12 [shape = 'u8[512]{0}', space=smem, size = 0x200, scoped, tag = 'input window, operand 9, single buffered']
    #allocation13 [shape = 'u8[8192]{0}', space=vmem, size = 0x2000, scoped, tag = 'output window, operand 0, single buffered']
    %19 = vsyncpa [#allocation3], 0
    %20 = vsyncpa [#allocation7], 0
    %21 = vsyncpa [#allocation10], 0
    %22 = vsyncpa [#allocation5], 0
    %23 = vsyncpa [#allocation4], 0
    // Predicated region
    $region2: #{tpu_custom_call.1} parent=1 // pred_check
      _
    $region3: #{tpu_custom_call.1} parent=1 // pred_check_branch
      %25 = sbr.rel (0) target = $region5
    $region4: #{tpu_custom_call.1} parent=1 // pred_region
      _
    $region5: #{tpu_custom_call.1} parent=1 // pred_fallthru
      _
    // Predicated region
    $region6: #{tpu_custom_call.1} parent=1 // pred_check
      _
    $region7: #{tpu_custom_call.1} parent=1 // pred_check_branch
      %27 = sbr.rel (0) target = $region9
    $region8: #{tpu_custom_call.1} parent=1 // pred_region
      _
    $region9: #{tpu_custom_call.1} parent=1 // pred_fallthru
      _
    // Predicated region
    $region10: #{tpu_custom_call.1} parent=1 // pred_check
      _
    $region11: #{tpu_custom_call.1} parent=1 // pred_check_branch
      %29 = sbr.rel (0) target = $region13
    $region12: #{tpu_custom_call.1} parent=1 // pred_region
      %s31 = ssub.s32 64, 64
      %32 = vsyncadd [#allocation3], %s31
      %s34 = sshll.u32 [#allocation2], 4
      %s35 = int_to_ptr.vmem [resolvable:$true] %s34
      %37 = dma.hbm_to_vmem [thread:$0]  %s2, 64, %s35, [#allocation3]
    $region13: #{tpu_custom_call.1} parent=1 // pred_fallthru
      _
    // Predicated region
    $region14: #{tpu_custom_call.1} parent=1 // pred_check
      _
    $region15: #{tpu_custom_call.1} parent=1 // pred_check_branch
      %39 = sbr.rel (0) target = $region17
    $region16: #{tpu_custom_call.1} parent=1 // pred_region
      %s41 = ssub.s32 16, 16
      %42 = vsyncadd [#allocation7], %s41
      %s44 = sshll.u32 [#allocation6], 4
      %s45 = int_to_ptr.vmem [resolvable:$true] %s44
      %47 = dma.hbm_to_vmem [thread:$0]  %s3, 16, %s45, [#allocation7]
    $region17: #{tpu_custom_call.1} parent=1 // pred_fallthru
      _
    // Predicated region
    $region18: #{tpu_custom_call.1} parent=1 // pred_check
      _
    $region19: #{tpu_custom_call.1} parent=1 // pred_check_branch
      %49 = sbr.rel (0) target = $region21
    $region20: #{tpu_custom_call.1} parent=1 // pred_region
      _
    $region21: #{tpu_custom_call.1} parent=1 // pred_fallthru
      _
    // Predicated region
    $region22: #{tpu_custom_call.1} parent=1 // pred_check
      _
    $region23: #{tpu_custom_call.1} parent=1 // pred_check_branch
      %51 = sbr.rel (0) target = $region25
    $region24: #{tpu_custom_call.1} parent=1 // pred_region
      %s53 = ssub.s32 64, 64
      %54 = vsyncadd [#allocation7], %s53
      %s56 = sshll.u32 [#allocation8], 4
      %s57 = int_to_ptr.vmem [resolvable:$true] %s56
      %59 = dma.hbm_to_vmem [thread:$0]  %s5, 64, %s57, [#allocation7]
    $region25: #{tpu_custom_call.1} parent=1 // pred_fallthru
      _
    // Predicated region
    $region26: #{tpu_custom_call.1} parent=1 // pred_check
      _
    $region27: #{tpu_custom_call.1} parent=1 // pred_check_branch
      %61 = sbr.rel (0) target = $region29
    $region28: #{tpu_custom_call.1} parent=1 // pred_region
      %s63 = ssub.s32 16, 16
      %64 = vsyncadd [#allocation10], %s63
      %s66 = sshll.u32 [#allocation9], 4
      %s67 = int_to_ptr.vmem [resolvable:$true] %s66
      %69 = dma.hbm_to_vmem [thread:$0]  %s6, 16, %s67, [#allocation10]
    $region29: #{tpu_custom_call.1} parent=1 // pred_fallthru
      _
    // Predicated region
    $region30: #{tpu_custom_call.1} parent=1 // pred_check
      _
    $region31: #{tpu_custom_call.1} parent=1 // pred_check_branch
      %71 = sbr.rel (0) target = $region33
    $region32: #{tpu_custom_call.1} parent=1 // pred_region
      _
    $region33: #{tpu_custom_call.1} parent=1 // pred_fallthru
      _
    // Predicated region
    $region34: #{tpu_custom_call.1} parent=1 // pred_check
      _
    $region35: #{tpu_custom_call.1} parent=1 // pred_check_branch
      %73 = sbr.rel (0) target = $region37
    $region36: #{tpu_custom_call.1} parent=1 // pred_region
      %s75 = ssub.s32 64, 64
      %76 = vsyncadd [#allocation10], %s75
      %s77 = sshll.u32 [#allocation11], 4
      %s78 = int_to_ptr.vmem [resolvable:$true] %s77
      %83 = dma.hbm_to_vmem [thread:$0]  %s8, 64, %s78, [#allocation10], 16, 16, 1
    $region37: #{tpu_custom_call.1} parent=1 // pred_fallthru
      _
    // Predicated region
    $region38: #{tpu_custom_call.1} parent=1 // pred_check
      _
    $region39: #{tpu_custom_call.1} parent=1 // pred_check_branch
      %85 = sbr.rel (0) target = $region41
    $region40: #{tpu_custom_call.1} parent=1 // pred_region
      %s87 = ssub.s32 16, 16
      %88 = vsyncadd [#allocation5], %s87
      %91 = dma.hbm_to_smem %s9, 16, [#allocation12], [#allocation5]
    $region41: #{tpu_custom_call.1} parent=1 // pred_fallthru
      _
    // Predicated region
    $region42: #{tpu_custom_call.1} parent=1 // pred_check
      _
    $region43: #{tpu_custom_call.1} parent=1 // pred_check_branch
      %93 = sbr.rel (0) target = $region45
    $region44: #{tpu_custom_call.1} parent=1 // pred_region
      _
    $region45: #{tpu_custom_call.1} parent=1 // pred_fallthru
      _
    // Predicated region
    $region46: #{tpu_custom_call.1} parent=1 // pred_check
      _
    $region47: #{tpu_custom_call.1} parent=1 // pred_check_branch
      %95 = sbr.rel (0) target = $region49
    $region48: #{tpu_custom_call.1} parent=1 // pred_region
      _
    $region49: #{tpu_custom_call.1} parent=1 // pred_fallthru
      _
    // Predicated region
    $region50: #{tpu_custom_call.1} parent=1 // pred_check
      _
    $region51: #{tpu_custom_call.1} parent=1 // pred_check_branch
      %97 = sbr.rel (0) target = $region53
    $region52: #{tpu_custom_call.1} parent=1 // pred_region
      _
    $region53: #{tpu_custom_call.1} parent=1 // pred_fallthru
      _
    // Predicated region
    $region54: #{tpu_custom_call.1} parent=1 // pred_check
      _
    $region55: #{tpu_custom_call.1} parent=1 // pred_check_branch
      %99 = sbr.rel (0) target = $region57
    $region56: #{tpu_custom_call.1} parent=1 // pred_region
      _
    $region57: #{tpu_custom_call.1} parent=1 // pred_fallthru
      _
    // Predicated region
    $region58: #{tpu_custom_call.1} parent=1 // pred_check
      _
    $region59: #{tpu_custom_call.1} parent=1 // pred_check_branch
      %101 = sbr.rel (0) target = $region61
    $region60: #{tpu_custom_call.1} parent=1 // pred_region
      %102 = dma.done [#allocation3], 64
    $region61: #{tpu_custom_call.1} parent=1 // pred_fallthru
      _
    // Predicated region
    $region62: #{tpu_custom_call.1} parent=1 // pred_check
      _
    $region63: #{tpu_custom_call.1} parent=1 // pred_check_branch
      %104 = sbr.rel (0) target = $region65
    $region64: #{tpu_custom_call.1} parent=1 // pred_region
      %105 = dma.done [#allocation7], 16
    $region65: #{tpu_custom_call.1} parent=1 // pred_fallthru
      _
    // Predicated region
    $region66: #{tpu_custom_call.1} parent=1 // pred_check
      _
    $region67: #{tpu_custom_call.1} parent=1 // pred_check_branch
      %107 = sbr.rel (0) target = $region69
    $region68: #{tpu_custom_call.1} parent=1 // pred_region
      %108 = dma.done [#allocation7], 64
    $region69: #{tpu_custom_call.1} parent=1 // pred_fallthru
      _
    // Predicated region
    $region70: #{tpu_custom_call.1} parent=1 // pred_check
      _
    $region71: #{tpu_custom_call.1} parent=1 // pred_check_branch
      %110 = sbr.rel (0) target = $region73
    $region72: #{tpu_custom_call.1} parent=1 // pred_region
      %111 = dma.done [#allocation10], 16
    $region73: #{tpu_custom_call.1} parent=1 // pred_fallthru
      _
    // Predicated region
    $region74: #{tpu_custom_call.1} parent=1 // pred_check
      _
    $region75: #{tpu_custom_call.1} parent=1 // pred_check_branch
      %113 = sbr.rel (0) target = $region77
    $region76: #{tpu_custom_call.1} parent=1 // pred_region
      %114 = dma.done [#allocation10], 64
    $region77: #{tpu_custom_call.1} parent=1 // pred_fallthru
      _
    // Predicated region
    $region78: #{tpu_custom_call.1} parent=1 // pred_check
      _
    $region79: #{tpu_custom_call.1} parent=1 // pred_check_branch
      %116 = sbr.rel (0) target = $region81
    $region80: #{tpu_custom_call.1} parent=1 // pred_region
      %117 = dma.done [#allocation5], 16
    $region81: #{tpu_custom_call.1} parent=1 // pred_fallthru
      _
    %118 = sfence
    %v120 = vld [vmem:[%s1] sm:$0xff]
    %v121 = vld [vmem:[%s1 + $0x8] sm:$0xff]
    %v122 = vpack.c.bf16 %v121, %v120
    %v123 = vld [vmem:[#allocation2] sm:$0xf]
    %v124 = vld [vmem:[#allocation6] sm:$0x1]
    %v126 = vlaneseq
    %v127 = vshrl.u32 %v126, 7
    %v128 = vsub.s32 0, %v127
    %v129 = vrot.slane %v124, %v128
    %vm131 = vcmask 64512
    %v133 = vsel %vm131, %v122, 0
    %vm135 = vcmask 1043456
    %v137 = vsel %vm135, %v123, 0
    %139 = vmatprep.subr.bf16.mxu0 0
    %140 = vmatpush1.bf16.msra.mxu0 0
    %141 = vmatprep.subr.bf16.mxu0 0
    %142 = vmatpush1.bf16.msra.mxu0 0
    %143 = vmatprep.subr.bf16.mxu0 0
    %144 = vmatpush1.bf16.msra.mxu0 0
    %145 = vmatprep.subr.bf16.mxu0 0
    %146 = vmatpush1.bf16.msra.mxu0 0
    %147 = vmatprep.subr.bf16.mxu0 0
    %148 = vmatpush1.bf16.msra.mxu0 0
    %149 = vmatprep.subr.bf16.mxu0 0
    %150 = vmatpush1.bf16.msra.mxu0 0
    %151 = vmatprep.subr.bf16.mxu0 0
    %152 = vmatpush1.bf16.msra.mxu0 0
    %153 = vmatprep.subr.bf16.mxu0 0
    %154 = vmatpush1.bf16.msra.mxu0 %v137
    %155 = vmatprep.subr.bf16.mxu0 0
    %156 = vmatpush2.bf16.msra.mxu0 0
    %157 = vmatprep.subr.bf16.mxu0 0
    %158 = vmatpush2.bf16.msra.mxu0 0
    %159 = vmatprep.subr.bf16.mxu0 0
    %160 = vmatpush2.bf16.msra.mxu0 0
    %161 = vmatprep.subr.bf16.mxu0 0
    %162 = vmatpush2.bf16.msra.mxu0 0
    %163 = vmatprep.subr.bf16.mxu0 0
    %164 = vmatpush2.bf16.msra.mxu0 0
    %165 = vmatprep.subr.bf16.mxu0 0
    %166 = vmatpush2.bf16.msra.mxu0 0
    %167 = vmatprep.subr.bf16.mxu0 0
    %168 = vmatpush2.bf16.msra.mxu0 0
    %169 = vmatprep.subr.bf16.mxu0 0
    %170 = vmatpush2.bf16.msra.mxu0 0
    %171 = vmatprep.mubr.bf16.mxu0 0
    %172 = vmatmul.mubr.bf16.gmra.mxu0 %v133
    %v173 = vpop.f32.mrf.mxu0
    %v174 = vadd.f32 %v129, %v173
    %v175 = vpop.f32.mrf.mxu0
    %v176 = vpop.f32.mrf.mxu0
    %v177 = vadd.f32 %v129, %v176
    %v178 = vpop.f32.mrf.mxu0
    %179 = vdwg.mxu0
    %v180 = vmax.f32 %v174, 0.0
    %v181 = vmax.f32 %v177, 0.0
    %v182 = vpack.c.bf16 %v181, %v180
    %v183 = vld [vmem:[%s4] sm:$0xf]
    %v184 = vld [vmem:[%s4 + $0x4] sm:$0xf]
    %v185 = vld [vmem:[%s4 + $0x8] sm:$0xf]
    %v186 = vld [vmem:[%s4 + $0xc] sm:$0xf]
    %v187 = vld [vmem:[%s0] sm:$0xff]
    %v188 = vld [vmem:[%s0 + $0x8] sm:$0xff]
    %v189 = vpack.c.bf16 %v188, %v187
    %v190 = vld [vmem:[#allocation8] sm:$0xf]
    %v192 = vsel %vm131, %v189, 0
    %v195 = vsel %vm135, %v190, 0
    %197 = vmatprep.subr.bf16.mxu0 0
    %198 = vmatpush1.bf16.msra.mxu0 0
    %199 = vmatprep.subr.bf16.mxu0 0
    %200 = vmatpush1.bf16.msra.mxu0 0
    %201 = vmatprep.subr.bf16.mxu0 0
    %202 = vmatpush1.bf16.msra.mxu0 0
    %203 = vmatprep.subr.bf16.mxu0 0
    %204 = vmatpush1.bf16.msra.mxu0 0
    %205 = vmatprep.subr.bf16.mxu0 0
    %206 = vmatpush1.bf16.msra.mxu0 0
    %207 = vmatprep.subr.bf16.mxu0 0
    %208 = vmatpush1.bf16.msra.mxu0 0
    %209 = vmatprep.subr.bf16.mxu0 0
    %210 = vmatpush1.bf16.msra.mxu0 0
    %211 = vmatprep.subr.bf16.mxu0 0
    %212 = vmatpush1.bf16.msra.mxu0 %v195
    %213 = vmatprep.subr.bf16.mxu0 0
    %214 = vmatpush2.bf16.msra.mxu0 0
    %215 = vmatprep.subr.bf16.mxu0 0
    %216 = vmatpush2.bf16.msra.mxu0 0
    %217 = vmatprep.subr.bf16.mxu0 0
    %218 = vmatpush2.bf16.msra.mxu0 0
    %219 = vmatprep.subr.bf16.mxu0 0
    %220 = vmatpush2.bf16.msra.mxu0 0
    %221 = vmatprep.subr.bf16.mxu0 0
    %222 = vmatpush2.bf16.msra.mxu0 0
    %223 = vmatprep.subr.bf16.mxu0 0
    %224 = vmatpush2.bf16.msra.mxu0 0
    %225 = vmatprep.subr.bf16.mxu0 0
    %226 = vmatpush2.bf16.msra.mxu0 0
    %227 = vmatprep.subr.bf16.mxu0 0
    %228 = vmatpush2.bf16.msra.mxu0 0
    %229 = vmatprep.mubr.bf16.mxu0 0
    %230 = vmatmul.mubr.bf16.gmra.mxu0 %v192
    %v231 = vpop.f32.mrf.mxu0
    %v232 = vadd.f32 0.0, %v231
    %v233 = vpop.f32.mrf.mxu0
    %v234 = vpop.f32.mrf.mxu0
    %v235 = vadd.f32 0.0, %v234
    %v236 = vpop.f32.mrf.mxu0
    %237 = vdwg.mxu0
    %v242 = vunpack.c.l.b16 %v183
    %v243 = vunpack.c.l.b16 %v184
    %v244 = vunpack.c.l.b16 %v185
    %v245 = vunpack.c.l.b16 %v186
    %v246 = vpack.c.b16 %v243, %v242
    %v247 = vpack.c.b16 %v245, %v244
    %vm250 = vcmask 261120
    %v252 = vsel %vm250, %v182, 0
    %254 = vmatprep.subr.bf16.mxu0 0
    %255 = vmatpush1.bf16.msra.mxu0 0
    %256 = vmatprep.subr.bf16.mxu0 0
    %257 = vmatpush1.bf16.msra.mxu0 0
    %258 = vmatprep.subr.bf16.mxu0 0
    %259 = vmatpush1.bf16.msra.mxu0 0
    %260 = vmatprep.subr.bf16.mxu0 0
    %261 = vmatpush1.bf16.msra.mxu0 0
    %262 = vmatprep.subr.bf16.mxu0 0
    %263 = vmatpush1.bf16.msra.mxu0 0
    %264 = vmatprep.subr.bf16.mxu0 0
    %265 = vmatpush1.bf16.msra.mxu0 0
    %266 = vmatprep.subr.bf16.mxu0 0
    %267 = vmatpush1.bf16.msra.mxu0 %v247
    %268 = vmatprep.subr.bf16.mxu0 0
    %269 = vmatpush1.bf16.msra.mxu0 %v246
    %270 = vmatprep.subr.bf16.mxu0 0
    %271 = vmatpush2.bf16.msra.mxu0 0
    %272 = vmatprep.subr.bf16.mxu0 0
    %273 = vmatpush2.bf16.msra.mxu0 0
    %274 = vmatprep.subr.bf16.mxu0 0
    %275 = vmatpush2.bf16.msra.mxu0 0
    %276 = vmatprep.subr.bf16.mxu0 0
    %277 = vmatpush2.bf16.msra.mxu0 0
    %278 = vmatprep.subr.bf16.mxu0 0
    %279 = vmatpush2.bf16.msra.mxu0 0
    %280 = vmatprep.subr.bf16.mxu0 0
    %281 = vmatpush2.bf16.msra.mxu0 0
    %282 = vmatprep.subr.bf16.mxu0 0
    %283 = vmatpush2.bf16.msra.mxu0 0
    %284 = vmatprep.subr.bf16.mxu0 0
    %285 = vmatpush2.bf16.msra.mxu0 0
    %286 = vmatprep.mubr.bf16.mxu0 0
    %287 = vmatmul.mubr.bf16.gmra.mxu0 %v252
    %v288 = vpop.f32.mrf.mxu0
    %v289 = vadd.f32 %v232, %v288
    %v290 = vpop.f32.mrf.mxu0
    %v291 = vpop.f32.mrf.mxu0
    %v292 = vadd.f32 %v235, %v291
    %v293 = vpop.f32.mrf.mxu0
    %294 = vdwg.mxu0
    %v295 = vld [vmem:[#allocation9] sm:$0x1]
    %v297 = vlaneseq
    %v298 = vshrl.u32 %v297, 7
    %v299 = vsub.s32 0, %v298
    %v300 = vrot.slane %v295, %v299
    %v302 = vadd.f32 %v289, %v300
    %v303 = vadd.f32 %v292, %v300
    %v304 = vmax.f32 %v302, 0.0
    %v305 = vmax.f32 %v303, 0.0
    %v306 = vpack.c.bf16 %v305, %v304
    %v307 = vld [vmem:[%s7] sm:$0xf]
    %v308 = vld [vmem:[%s7 + $0x4] sm:$0xf]
    %v309 = vld [vmem:[%s7 + $0x8] sm:$0xf]
    %v310 = vld [vmem:[%s7 + $0xc] sm:$0xf]
    %v311 = vld [vmem:[#allocation11] sm:$0x1]
    %v313 = vlaneseq
    %v314 = vshrl.u32 %v313, 7
    %v315 = vsub.s32 0, %v314
    %v316 = vrot.slane %v311, %v315
    %v322 = vunpack.c.l.b16 %v307
    %v323 = vunpack.c.l.b16 %v308
    %v324 = vunpack.c.l.b16 %v309
    %v325 = vunpack.c.l.b16 %v310
    %v326 = vpack.c.b16 %v323, %v322
    %v327 = vpack.c.b16 %v325, %v324
    %v331 = vsel %vm250, %v306, 0
    %333 = vmatprep.subr.bf16.mxu0 0
    %334 = vmatpush1.bf16.msra.mxu0 0
    %335 = vmatprep.subr.bf16.mxu0 0
    %336 = vmatpush1.bf16.msra.mxu0 0
    %337 = vmatprep.subr.bf16.mxu0 0
    %338 = vmatpush1.bf16.msra.mxu0 0
    %339 = vmatprep.subr.bf16.mxu0 0
    %340 = vmatpush1.bf16.msra.mxu0 0
    %341 = vmatprep.subr.bf16.mxu0 0
    %342 = vmatpush1.bf16.msra.mxu0 0
    %343 = vmatprep.subr.bf16.mxu0 0
    %344 = vmatpush1.bf16.msra.mxu0 0
    %345 = vmatprep.subr.bf16.mxu0 0
    %346 = vmatpush1.bf16.msra.mxu0 %v327
    %347 = vmatprep.subr.bf16.mxu0 0
    %348 = vmatpush1.bf16.msra.mxu0 %v326
    %349 = vmatprep.subr.bf16.mxu0 0
    %350 = vmatpush2.bf16.msra.mxu0 0
    %351 = vmatprep.subr.bf16.mxu0 0
    %352 = vmatpush2.bf16.msra.mxu0 0
    %353 = vmatprep.subr.bf16.mxu0 0
    %354 = vmatpush2.bf16.msra.mxu0 0
    %355 = vmatprep.subr.bf16.mxu0 0
    %356 = vmatpush2.bf16.msra.mxu0 0
    %357 = vmatprep.subr.bf16.mxu0 0
    %358 = vmatpush2.bf16.msra.mxu0 0
    %359 = vmatprep.subr.bf16.mxu0 0
    %360 = vmatpush2.bf16.msra.mxu0 0
    %361 = vmatprep.subr.bf16.mxu0 0
    %362 = vmatpush2.bf16.msra.mxu0 0
    %363 = vmatprep.subr.bf16.mxu0 0
    %364 = vmatpush2.bf16.msra.mxu0 0
    %365 = vmatprep.mubr.bf16.mxu0 0
    %366 = vmatmul.mubr.bf16.gmra.mxu0 %v331
    %v367 = vpop.f32.mrf.mxu0
    %v368 = vadd.f32 %v316, %v367
    %v369 = vpop.f32.mrf.mxu0
    %v370 = vpop.f32.mrf.mxu0
    %v371 = vadd.f32 %v316, %v370
    %v372 = vpop.f32.mrf.mxu0
    %373 = vdwg.mxu0
    %s374 = sld [smem:[#allocation12]]
    %v375 = vmax.f32 %v368, 0.0
    %v376 = vmax.f32 %v371, 0.0
    %v377 = vstv %s374
    %v378 = vmul.f32 %v377, %v375
    %v379 = vmul.f32 %v377, %v376
    %v380 = vadd.f32 %v304, %v378
    %v381 = vadd.f32 %v305, %v379
    %v382 = vpack.c.bf16 %v381, %v380
    %s383 = scalar_lea.vmem %s7, 16
    %v384 = vld [vmem:[%s383] sm:$0xf]
    %v385 = vld [vmem:[%s383 + $0x4] sm:$0xf]
    %v386 = vld [vmem:[%s383 + $0x8] sm:$0xf]
    %v387 = vld [vmem:[%s383 + $0xc] sm:$0xf]
    %s388 = scalar_lea.vmem [#allocation11], 1
    %v389 = vld [vmem:[%s388] sm:$0x1]
    %v391 = vlaneseq
    %v392 = vshrl.u32 %v391, 7
    %v393 = vsub.s32 0, %v392
    %v394 = vrot.slane %v389, %v393
    %v400 = vunpack.c.l.b16 %v384
    %v401 = vunpack.c.l.b16 %v385
    %v402 = vunpack.c.l.b16 %v386
    %v403 = vunpack.c.l.b16 %v387
    %v404 = vpack.c.b16 %v401, %v400
    %v405 = vpack.c.b16 %v403, %v402
    %v409 = vsel %vm250, %v382, 0
    %411 = vmatprep.subr.bf16.mxu0 0
    %412 = vmatpush1.bf16.msra.mxu0 0
    %413 = vmatprep.subr.bf16.mxu0 0
    %414 = vmatpush1.bf16.msra.mxu0 0
    %415 = vmatprep.subr.bf16.mxu0 0
    %416 = vmatpush1.bf16.msra.mxu0 0
    %417 = vmatprep.subr.bf16.mxu0 0
    %418 = vmatpush1.bf16.msra.mxu0 0
    %419 = vmatprep.subr.bf16.mxu0 0
    %420 = vmatpush1.bf16.msra.mxu0 0
    %421 = vmatprep.subr.bf16.mxu0 0
    %422 = vmatpush1.bf16.msra.mxu0 0
    %423 = vmatprep.subr.bf16.mxu0 0
    %424 = vmatpush1.bf16.msra.mxu0 %v405
    %425 = vmatprep.subr.bf16.mxu0 0
    %426 = vmatpush1.bf16.msra.mxu0 %v404
    %427 = vmatprep.subr.bf16.mxu0 0
    %428 = vmatpush2.bf16.msra.mxu0 0
    %429 = vmatprep.subr.bf16.mxu0 0
    %430 = vmatpush2.bf16.msra.mxu0 0
    %431 = vmatprep.subr.bf16.mxu0 0
    %432 = vmatpush2.bf16.msra.mxu0 0
    %433 = vmatprep.subr.bf16.mxu0 0
    %434 = vmatpush2.bf16.msra.mxu0 0
    %435 = vmatprep.subr.bf16.mxu0 0
    %436 = vmatpush2.bf16.msra.mxu0 0
    %437 = vmatprep.subr.bf16.mxu0 0
    %438 = vmatpush2.bf16.msra.mxu0 0
    %439 = vmatprep.subr.bf16.mxu0 0
    %440 = vmatpush2.bf16.msra.mxu0 0
    %441 = vmatprep.subr.bf16.mxu0 0
    %442 = vmatpush2.bf16.msra.mxu0 0
    %443 = vmatprep.mubr.bf16.mxu0 0
    %444 = vmatmul.mubr.bf16.gmra.mxu0 %v409
    %v445 = vpop.f32.mrf.mxu0
    %v446 = vadd.f32 %v394, %v445
    %v447 = vpop.f32.mrf.mxu0
    %v448 = vpop.f32.mrf.mxu0
    %v449 = vadd.f32 %v394, %v448
    %v450 = vpop.f32.mrf.mxu0
    %451 = vdwg.mxu0
    %s452 = sld [smem:[#allocation12 + $0x1]]
    %v453 = vmax.f32 %v446, 0.0
    %v454 = vmax.f32 %v449, 0.0
    %v455 = vstv %s452
    %v456 = vmul.f32 %v455, %v453
    %v457 = vmul.f32 %v455, %v454
    %v458 = vadd.f32 %v380, %v456
    %v459 = vadd.f32 %v381, %v457
    %v460 = vpack.c.bf16 %v459, %v458
    %s461 = scalar_lea.vmem %s7, 32
    %v462 = vld [vmem:[%s461] sm:$0xf]
    %v463 = vld [vmem:[%s461 + $0x4] sm:$0xf]
    %v464 = vld [vmem:[%s461 + $0x8] sm:$0xf]
    %v465 = vld [vmem:[%s461 + $0xc] sm:$0xf]
    %s466 = scalar_lea.vmem [#allocation11], 2
    %v467 = vld [vmem:[%s466] sm:$0x1]
    %v469 = vlaneseq
    %v470 = vshrl.u32 %v469, 7
    %v471 = vsub.s32 0, %v470
    %v472 = vrot.slane %v467, %v471
    %v478 = vunpack.c.l.b16 %v462
    %v479 = vunpack.c.l.b16 %v463
    %v480 = vunpack.c.l.b16 %v464
    %v481 = vunpack.c.l.b16 %v465
    %v482 = vpack.c.b16 %v479, %v478
    %v483 = vpack.c.b16 %v481, %v480
    %v487 = vsel %vm250, %v460, 0
    %489 = vmatprep.subr.bf16.mxu0 0
    %490 = vmatpush1.bf16.msra.mxu0 0
    %491 = vmatprep.subr.bf16.mxu0 0
    %492 = vmatpush1.bf16.msra.mxu0 0
    %493 = vmatprep.subr.bf16.mxu0 0
    %494 = vmatpush1.bf16.msra.mxu0 0
    %495 = vmatprep.subr.bf16.mxu0 0
    %496 = vmatpush1.bf16.msra.mxu0 0
    %497 = vmatprep.subr.bf16.mxu0 0
    %498 = vmatpush1.bf16.msra.mxu0 0
    %499 = vmatprep.subr.bf16.mxu0 0
    %500 = vmatpush1.bf16.msra.mxu0 0
    %501 = vmatprep.subr.bf16.mxu0 0
    %502 = vmatpush1.bf16.msra.mxu0 %v483
    %503 = vmatprep.subr.bf16.mxu0 0
    %504 = vmatpush1.bf16.msra.mxu0 %v482
    %505 = vmatprep.subr.bf16.mxu0 0
    %506 = vmatpush2.bf16.msra.mxu0 0
    %507 = vmatprep.subr.bf16.mxu0 0
    %508 = vmatpush2.bf16.msra.mxu0 0
    %509 = vmatprep.subr.bf16.mxu0 0
    %510 = vmatpush2.bf16.msra.mxu0 0
    %511 = vmatprep.subr.bf16.mxu0 0
    %512 = vmatpush2.bf16.msra.mxu0 0
    %513 = vmatprep.subr.bf16.mxu0 0
    %514 = vmatpush2.bf16.msra.mxu0 0
    %515 = vmatprep.subr.bf16.mxu0 0
    %516 = vmatpush2.bf16.msra.mxu0 0
    %517 = vmatprep.subr.bf16.mxu0 0
    %518 = vmatpush2.bf16.msra.mxu0 0
    %519 = vmatprep.subr.bf16.mxu0 0
    %520 = vmatpush2.bf16.msra.mxu0 0
    %521 = vmatprep.mubr.bf16.mxu0 0
    %522 = vmatmul.mubr.bf16.gmra.mxu0 %v487
    %v523 = vpop.f32.mrf.mxu0
    %v524 = vadd.f32 %v472, %v523
    %v525 = vpop.f32.mrf.mxu0
    %v526 = vpop.f32.mrf.mxu0
    %v527 = vadd.f32 %v472, %v526
    %v528 = vpop.f32.mrf.mxu0
    %529 = vdwg.mxu0
    %s530 = sld [smem:[#allocation12 + $0x2]]
    %v531 = vmax.f32 %v524, 0.0
    %v532 = vmax.f32 %v527, 0.0
    %v533 = vstv %s530
    %v534 = vmul.f32 %v533, %v531
    %v535 = vmul.f32 %v533, %v532
    %v536 = vadd.f32 %v458, %v534
    %v537 = vadd.f32 %v459, %v535
    %v538 = vpack.c.bf16 %v537, %v536
    %s539 = scalar_lea.vmem %s7, 48
    %v540 = vld [vmem:[%s539] sm:$0xf]
    %v541 = vld [vmem:[%s539 + $0x4] sm:$0xf]
    %v542 = vld [vmem:[%s539 + $0x8] sm:$0xf]
    %v543 = vld [vmem:[%s539 + $0xc] sm:$0xf]
    %s544 = scalar_lea.vmem [#allocation11], 3
    %v545 = vld [vmem:[%s544] sm:$0x1]
    %v547 = vlaneseq
    %v548 = vshrl.u32 %v547, 7
    %v549 = vsub.s32 0, %v548
    %v550 = vrot.slane %v545, %v549
    %v556 = vunpack.c.l.b16 %v540
    %v557 = vunpack.c.l.b16 %v541
    %v558 = vunpack.c.l.b16 %v542
    %v559 = vunpack.c.l.b16 %v543
    %v560 = vpack.c.b16 %v557, %v556
    %v561 = vpack.c.b16 %v559, %v558
    %v565 = vsel %vm250, %v538, 0
    %567 = vmatprep.subr.bf16.mxu0 0
    %568 = vmatpush1.bf16.msra.mxu0 0
    %569 = vmatprep.subr.bf16.mxu0 0
    %570 = vmatpush1.bf16.msra.mxu0 0
    %571 = vmatprep.subr.bf16.mxu0 0
    %572 = vmatpush1.bf16.msra.mxu0 0
    %573 = vmatprep.subr.bf16.mxu0 0
    %574 = vmatpush1.bf16.msra.mxu0 0
    %575 = vmatprep.subr.bf16.mxu0 0
    %576 = vmatpush1.bf16.msra.mxu0 0
    %577 = vmatprep.subr.bf16.mxu0 0
    %578 = vmatpush1.bf16.msra.mxu0 0
    %579 = vmatprep.subr.bf16.mxu0 0
    %580 = vmatpush1.bf16.msra.mxu0 %v561
    %581 = vmatprep.subr.bf16.mxu0 0
    %582 = vmatpush1.bf16.msra.mxu0 %v560
    %583 = vmatprep.subr.bf16.mxu0 0
    %584 = vmatpush2.bf16.msra.mxu0 0
    %585 = vmatprep.subr.bf16.mxu0 0
    %586 = vmatpush2.bf16.msra.mxu0 0
    %587 = vmatprep.subr.bf16.mxu0 0
    %588 = vmatpush2.bf16.msra.mxu0 0
    %589 = vmatprep.subr.bf16.mxu0 0
    %590 = vmatpush2.bf16.msra.mxu0 0
    %591 = vmatprep.subr.bf16.mxu0 0
    %592 = vmatpush2.bf16.msra.mxu0 0
    %593 = vmatprep.subr.bf16.mxu0 0
    %594 = vmatpush2.bf16.msra.mxu0 0
    %595 = vmatprep.subr.bf16.mxu0 0
    %596 = vmatpush2.bf16.msra.mxu0 0
    %597 = vmatprep.subr.bf16.mxu0 0
    %598 = vmatpush2.bf16.msra.mxu0 0
    %599 = vmatprep.mubr.bf16.mxu0 0
    %600 = vmatmul.mubr.bf16.gmra.mxu0 %v565
    %v601 = vpop.f32.mrf.mxu0
    %v602 = vadd.f32 %v550, %v601
    %v603 = vpop.f32.mrf.mxu0
    %v604 = vpop.f32.mrf.mxu0
    %v605 = vadd.f32 %v550, %v604
    %v606 = vpop.f32.mrf.mxu0
    %607 = vdwg.mxu0
    %s608 = sld [smem:[#allocation12 + $0x3]]
    %v609 = vmax.f32 %v602, 0.0
    %v610 = vmax.f32 %v605, 0.0
    %v611 = vstv %s608
    %v612 = vmul.f32 %v611, %v609
    %v613 = vmul.f32 %v611, %v610
    %v614 = vadd.f32 %v536, %v612
    %v615 = vadd.f32 %v537, %v613
    %v616 = vpack.c.bf16 %v615, %v614
    %v617 = vld [vmem:[%s10] sm:$0xf]
    %v618 = vld [vmem:[%s10 + $0x4] sm:$0xf]
    %v619 = vld [vmem:[%s10 + $0x8] sm:$0xf]
    %v620 = vld [vmem:[%s10 + $0xc] sm:$0xf]
    %v621 = vld [vmem:[%s11] sm:$0x1]
    %v623 = vlaneseq
    %v624 = vshrl.u32 %v623, 7
    %v625 = vsub.s32 0, %v624
    %v626 = vrot.slane %v621, %v625
    %v632 = vunpack.c.l.b16 %v617
    %v633 = vunpack.c.l.b16 %v618
    %v634 = vunpack.c.l.b16 %v619
    %v635 = vunpack.c.l.b16 %v620
    %v636 = vpack.c.b16 %v633, %v632
    %v637 = vpack.c.b16 %v635, %v634
    %v641 = vsel %vm250, %v616, 0
    %643 = vmatprep.subr.bf16.mxu0 0
    %644 = vmatpush1.bf16.msra.mxu0 0
    %645 = vmatprep.subr.bf16.mxu0 0
    %646 = vmatpush1.bf16.msra.mxu0 0
    %647 = vmatprep.subr.bf16.mxu0 0
    %648 = vmatpush1.bf16.msra.mxu0 0
    %649 = vmatprep.subr.bf16.mxu0 0
    %650 = vmatpush1.bf16.msra.mxu0 0
    %651 = vmatprep.subr.bf16.mxu0 0
    %652 = vmatpush1.bf16.msra.mxu0 0
    %653 = vmatprep.subr.bf16.mxu0 0
    %654 = vmatpush1.bf16.msra.mxu0 0
    %655 = vmatprep.subr.bf16.mxu0 0
    %656 = vmatpush1.bf16.msra.mxu0 %v637
    %657 = vmatprep.subr.bf16.mxu0 0
    %658 = vmatpush1.bf16.msra.mxu0 %v636
    %659 = vmatprep.subr.bf16.mxu0 0
    %660 = vmatpush2.bf16.msra.mxu0 0
    %661 = vmatprep.subr.bf16.mxu0 0
    %662 = vmatpush2.bf16.msra.mxu0 0
    %663 = vmatprep.subr.bf16.mxu0 0
    %664 = vmatpush2.bf16.msra.mxu0 0
    %665 = vmatprep.subr.bf16.mxu0 0
    %666 = vmatpush2.bf16.msra.mxu0 0
    %667 = vmatprep.subr.bf16.mxu0 0
    %668 = vmatpush2.bf16.msra.mxu0 0
    %669 = vmatprep.subr.bf16.mxu0 0
    %670 = vmatpush2.bf16.msra.mxu0 0
    %671 = vmatprep.subr.bf16.mxu0 0
    %672 = vmatpush2.bf16.msra.mxu0 0
    %673 = vmatprep.subr.bf16.mxu0 0
    %674 = vmatpush2.bf16.msra.mxu0 0
    %675 = vmatprep.mubr.bf16.mxu0 0
    %676 = vmatmul.mubr.bf16.gmra.mxu0 %v641
    %v677 = vpop.f32.mrf.mxu0
    %v678 = vadd.f32 %v626, %v677
    %v679 = vpop.f32.mrf.mxu0
    %v680 = vpop.f32.mrf.mxu0
    %v681 = vadd.f32 %v626, %v680
    %v682 = vpop.f32.mrf.mxu0
    %683 = vdwg.mxu0
    %v684 = vmax.f32 %v678, 0.0
    %v685 = vmax.f32 %v681, 0.0
    %v686 = vpack.c.bf16 %v685, %v684
    %v687 = vld [vmem:[%s12] sm:$0xf]
    %v688 = vld [vmem:[%s12 + $0x4] sm:$0xf]
    %v689 = vld [vmem:[%s12 + $0x8] sm:$0xf]
    %v690 = vld [vmem:[%s12 + $0xc] sm:$0xf]
    %v691 = vld [vmem:[%s12 + $0x10] sm:$0xf]
    %v692 = vld [vmem:[%s12 + $0x14] sm:$0xf]
    %v693 = vld [vmem:[%s12 + $0x18] sm:$0xf]
    %v694 = vld [vmem:[%s12 + $0x1c] sm:$0xf]
    %v695 = vld [vmem:[%s13] sm:$0x1]
    %v697 = vlaneseq
    %v698 = vshrl.u32 %v697, 7
    %v699 = vsub.s32 0, %v698
    %v700 = vrot.slane %v695, %v699
    %v710 = vunpack.c.l.b16 %v687
    %v711 = vunpack.c.l.b16 %v688
    %v712 = vunpack.c.l.b16 %v689
    %v713 = vunpack.c.l.b16 %v690
    %v714 = vunpack.c.l.b16 %v691
    %v715 = vunpack.c.l.b16 %v692
    %v716 = vunpack.c.l.b16 %v693
    %v717 = vunpack.c.l.b16 %v694
    %v718 = vpack.c.b16 %v711, %v710
    %v719 = vpack.c.b16 %v713, %v712
    %v720 = vpack.c.b16 %v715, %v714
    %v721 = vpack.c.b16 %v717, %v716
    %vm726 = vcmask 523264
    %v728 = vsel %vm726, %v686, 0
    %730 = vmatprep.subr.bf16.mxu0 0
    %731 = vmatpush1.bf16.msra.mxu0 0
    %732 = vmatprep.subr.bf16.mxu0 0
    %733 = vmatpush1.bf16.msra.mxu0 0
    %734 = vmatprep.subr.bf16.mxu0 0
    %735 = vmatpush1.bf16.msra.mxu0 0
    %736 = vmatprep.subr.bf16.mxu0 0
    %737 = vmatpush1.bf16.msra.mxu0 0
    %738 = vmatprep.subr.bf16.mxu0 0
    %739 = vmatpush1.bf16.msra.mxu0 %v721
    %740 = vmatprep.subr.bf16.mxu0 0
    %741 = vmatpush1.bf16.msra.mxu0 %v720
    %742 = vmatprep.subr.bf16.mxu0 0
    %743 = vmatpush1.bf16.msra.mxu0 %v719
    %744 = vmatprep.subr.bf16.mxu0 0
    %745 = vmatpush1.bf16.msra.mxu0 %v718
    %746 = vmatprep.subr.bf16.mxu0 0
    %747 = vmatpush2.bf16.msra.mxu0 0
    %748 = vmatprep.subr.bf16.mxu0 0
    %749 = vmatpush2.bf16.msra.mxu0 0
    %750 = vmatprep.subr.bf16.mxu0 0
    %751 = vmatpush2.bf16.msra.mxu0 0
    %752 = vmatprep.subr.bf16.mxu0 0
    %753 = vmatpush2.bf16.msra.mxu0 0
    %754 = vmatprep.subr.bf16.mxu0 0
    %755 = vmatpush2.bf16.msra.mxu0 0
    %756 = vmatprep.subr.bf16.mxu0 0
    %757 = vmatpush2.bf16.msra.mxu0 0
    %758 = vmatprep.subr.bf16.mxu0 0
    %759 = vmatpush2.bf16.msra.mxu0 0
    %760 = vmatprep.subr.bf16.mxu0 0
    %761 = vmatpush2.bf16.msra.mxu0 0
    %762 = vmatprep.mubr.bf16.mxu0 0
    %763 = vmatmul.mubr.bf16.gmra.mxu0 %v728
    %v764 = vpop.f32.mrf.mxu0
    %v765 = vadd.f32 %v700, %v764
    %v766 = vpop.f32.mrf.mxu0
    %v767 = vpop.f32.mrf.mxu0
    %v768 = vadd.f32 %v700, %v767
    %v769 = vpop.f32.mrf.mxu0
    %770 = vdwg.mxu0
    %v771 = vtanh.pop %v765
    %v772 = vtanh.pop %v768
    %vm773 = vcmask 130048
    %774 = vst.msk [vmem:[#allocation13] sm:$0xff] %vm773, %v771
    %775 = vst.msk [vmem:[#allocation13 + $0x8] sm:$0xff] %vm773, %v772
    // Predicated region
    $region82: #{tpu_custom_call.1} parent=1 // pred_check
      _
    $region83: #{tpu_custom_call.1} parent=1 // pred_check_branch
      %777 = sbr.rel (0) target = $region85
    $region84: #{tpu_custom_call.1} parent=1 // pred_region
      %s779 = ssub.s32 256, 256
      %780 = vsyncadd [#allocation4], %s779
      %s781 = sshll.u32 [#allocation13], 4
      %s782 = int_to_ptr.vmem [resolvable:$true] %s781
      %787 = dma.vmem_to_hbm [thread:$0]  %s782, 256, %s14, [#allocation4], 128, 128, 8
    $region85: #{tpu_custom_call.1} parent=1 // pred_fallthru
      _
    // Predicated region
    $region86: #{tpu_custom_call.1} parent=1 // pred_check
      _
    $region87: #{tpu_custom_call.1} parent=1 // pred_check_branch
      %789 = sbr.rel (0) target = $region89
    $region88: #{tpu_custom_call.1} parent=1 // pred_region
      %790 = dma.done [#allocation4], 256
    $region89: #{tpu_custom_call.1} parent=1 // pred_fallthru
      _
    %791 = vsyncpa [#allocation3], 1
    %792 = vsyncpa [#allocation7], 1
    %793 = vsyncpa [#allocation10], 1
    %794 = vsyncpa [#allocation4], 1
    %795 = vsyncpa [#allocation5], 1

</llo_original>
